<compile_context>
chip_gen: v7x
topology: tpu7x:2x2x1
jax: 0.10.0
libtpu: 0.0.40
codegen_flags: <defaults>
</compile_context>

<pallas_src>
import math
from functools import partial

import numpy as np
import jax
import jax.numpy as jnp
from jax import lax
from jax.experimental import pallas as pl
from jax.experimental.pallas import tpu as pltpu

LANE = 128


def _round_up(x, m):
    return ((x + m - 1) // m) * m


def _pad_axis(a, axis, target):
    if a.shape[axis] == target:
        return a
    widths = [(0, 0)] * a.ndim
    widths[axis] = (0, target - a.shape[axis])
    return jnp.pad(a, widths)


# ------------------------------ fused Pallas kernel --------------------------

def _tcn_fused_kernel(x_ref, mask_ref, w1_ref, b1_ref, w2_ref, b2_ref, *rest,
                      dilations, kernel_size, has_downsample):
    if has_downsample:
        wd_ref, bd_ref, o_ref = rest
    else:
        (o_ref,) = rest

    bt, T, cp = x_ref.shape
    M = bt * T
    K = kernel_size
    f32, bf16 = jnp.float32, jnp.bfloat16

    # Fold batch into the MXU M dimension: activations live as [bt*T, cp] and the
    # whole network stays resident in VMEM/vregs between levels.
    h = x_ref[...].reshape(M, cp).astype(f32)
    # time position of each row inside its own sequence (guards the roll
    # wraparound across both the causal boundary and sequence boundaries)
    t_in_seq = lax.broadcasted_iota(jnp.int32, (M, 1), 0) % T

    def causal_conv(h_f32, h_bf, masks, w_ref, b_ref, level, dilation):
        # Build the [M, K*cp] tap slab (tap k is shifted by (K-1-k)*dilation with
        # causally-padded rows zeroed) and contract all K taps in ONE K*cp-deep
        # matmul: fills the 256-deep MXU on v6e/v7x instead of K cp-deep dots.
        taps = []
        for k in range(K):
            shift = (K - 1 - k) * dilation
            if shift == 0:
                taps.append(h_bf)                          # reuse hoisted bf16 cast
            elif shift >= T:
                taps.append(jnp.zeros((M, cp), bf16))      # tap fully in zero padding
            else:
                rolled = pltpu.roll(h_f32, shift=shift, axis=0)        # XLU rotate
                taps.append(jnp.where(masks[shift], rolled, 0.0).astype(bf16))
        x_cat = taps[0] if K == 1 else jnp.concatenate(taps, axis=-1)  # 128-aligned
        return jnp.dot(x_cat, w_ref[level], preferred_element_type=f32) + b_ref[level]

    for level, d in enumerate(dilations):
        # causal-shift masks are shared by both convs of this level (hoisted)
        masks = {}
        for k in range(K):
            shift = (K - 1 - k) * d
            if 0 < shift < T and shift not in masks:
                masks[shift] = t_in_seq >= shift
        h_bf = h.astype(bf16)                    # one cast, reused by conv1 + downsample
        h1 = jnp.maximum(causal_conv(h, h_bf, masks, w1_ref, b1_ref, level, d), 0.0)
        h1_bf = h1.astype(bf16)
        h2 = jnp.maximum(causal_conv(h1, h1_bf, masks, w2_ref, b2_ref, level, d), 0.0)
        if level == 0 and has_downsample:
            res = jnp.dot(h_bf, wd_ref[...], preferred_element_type=f32) + bd_ref[...]
        else:
            res = h
        h = jnp.maximum(h2 + res, 0.0)           # f32 carry between levels

    # Fused get_last_visit: pick the features of the last valid timestep.  Kept
    # as an exact f32 one-hot reduce (VPU) so the output is not rounded to bf16.
    valid = jnp.sum(mask_ref[...], axis=-1, keepdims=True).astype(jnp.int32)  # [bt,1,1]
    idx = jnp.where(valid > 0, valid - 1, T - 1)          # all-invalid row -> last step
    t3 = lax.broadcasted_iota(jnp.int32, (bt, T, 1), 1)
    onehot = (t3 == idx).astype(f32)                      # [bt, T, 1]
    last = jnp.sum(h.reshape(bt, T, cp) * onehot, axis=1, keepdims=True)
    o_ref[...] = last.astype(o_ref.dtype)                 # [bt, 1, cp] lane-dense


# ------------------------------ wrappers --------------------------------------

def pack_tcn_params(params, input_dim):
    """Pad channels to a lane-dense multiple of 128, fuse the K conv taps along
    the contraction axis ([K, Cin, Cout] -> [K*cp, cp]), stack all levels, and
    cast MXU operands to bf16 (accumulation stays f32 in-kernel)."""
    if any(p["wd"] is not None for p in params[1:]):
        # TODO(synk): per-level downsample convs (list-valued hidden_dim); the TCN
        # module passes an int hidden_dim so only level 0 can need a downsample.
        raise NotImplementedError("downsample is only supported at level 0")
    widths = [input_dim] + [p["w1"].shape[-1] for p in params]
    cp = _round_up(max(widths), LANE)
    K = params[0]["w1"].shape[0]

    def fuse_taps(w):                                     # [K, Cin, Cout] -> [K*cp, cp]
        w = _pad_axis(_pad_axis(w, 1, cp), 2, cp)
        return w.reshape(K * cp, cp)

    packed = {
        "w1": jnp.stack([fuse_taps(p["w1"]) for p in params]).astype(jnp.bfloat16),
        "w2": jnp.stack([fuse_taps(p["w2"]) for p in params]).astype(jnp.bfloat16),
        "b1": jnp.stack([_pad_axis(p["b1"], 1, cp) for p in params]).astype(jnp.float32),
        "b2": jnp.stack([_pad_axis(p["b2"], 1, cp) for p in params]).astype(jnp.float32),
        "dilations": tuple(int(p["dilation"]) for p in params),
        "kernel_size": K, "cp": cp, "hidden_dim": params[-1]["w1"].shape[-1],
        "wd": None, "bd": None,
    }
    if params[0]["wd"] is not None:
        packed["wd"] = _pad_axis(_pad_axis(params[0]["wd"], 0, cp), 1, cp).astype(jnp.bfloat16)
        packed["bd"] = _pad_axis(params[0]["bd"], 1, cp).astype(jnp.float32)
    return packed


def tcn_forward(packed, x, mask):
    """x: [B, T, input_dim], mask: [B, T] -> [B, hidden_dim] (TCN.forward, eval)."""
    B, T, _ = x.shape
    cp, K = packed["cp"], packed["kernel_size"]
    L = packed["w1"].shape[0]
    has_down = packed["wd"] is not None

    weight_args = [packed["w1"], packed["b1"], packed["w2"], packed["b2"]]
    if has_down:
        weight_args += [packed["wd"], packed["bd"]]
    # Resident weights are double-buffered by the default pipeliner (x2).
    # TODO(synk): pipeline_mode=pl.Buffered(1) on the grid-invariant weight specs
    # would halve this on v7x's 64 MiB VMEM.
    weight_bytes = 2 * sum(int(np.prod(a.shape)) * a.dtype.itemsize for a in weight_args)
    x_itemsize = 2 if has_down else 4      # bf16 x when it only feeds bf16 matmuls

    def vmem_estimate(bt_):
        M = bt_ * T
        blocks = 2 * (bt_ * T * cp * x_itemsize + bt_ * T * 4 + bt_ * cp * 4)
        temps = M * cp * (4 * 4 + 2 * (K + 1))   # ~4 live f32 [M,cp] + bf16 tap slab
        return weight_bytes + blocks + temps

    # Rows per grid step: target >= ~1024 MXU rows (no forced >=2 grid steps on
    # single-TC v5e/v6e; on v7x the grid only splits when every step still gets a
    # full slab), capped by a v7x-conscious VMEM budget.
    bt = max(1, min(B, -(-1024 // max(T, 1))))
    while bt > 1 and vmem_estimate(bt) > (44 << 20):      # headroom under v7x's 64 MiB
        bt -= 1
    B_pad = _round_up(B, bt)                # pad batch instead of degrading bt to 1

    x_p = _pad_axis(x.astype(jnp.float32), 2, cp)         # [B, T, cp] lane-dense
    if has_down:
        # x only feeds bf16 MXU ops (conv1 taps + 1x1 downsample), so a bf16 HBM
        # copy halves the input DMA with bit-identical results.
        x_p = x_p.astype(jnp.bfloat16)
    # TODO(synk): ship x at its true input_dim (full-dim last block) and widen
    # in-kernel to drop the channel-padding round trip entirely.
    mask3 = mask.astype(jnp.float32).reshape(B, 1, T)     # [B, 1, T]
    if B_pad != B:
        x_p = jnp.pad(x_p, ((0, B_pad - B), (0, 0), (0, 0)))
        mask3 = jnp.pad(mask3, ((0, B_pad - B), (0, 0), (0, 0)))

    kernel = partial(_tcn_fused_kernel, dilations=packed["dilations"],
                     kernel_size=K, has_downsample=has_down)

    in_specs = [
        pl.BlockSpec((bt, T, cp), lambda i: (i, 0, 0)),        # x (per batch tile)
        pl.BlockSpec((bt, 1, T), lambda i: (i, 0, 0)),         # mask
        pl.BlockSpec((L, K * cp, cp), lambda i: (0, 0, 0)),    # w1, taps fused (resident)
        pl.BlockSpec((L, 1, cp), lambda i: (0, 0, 0)),         # b1
        pl.BlockSpec((L, K * cp, cp), lambda i: (0, 0, 0)),    # w2
        pl.BlockSpec((L, 1, cp), lambda i: (0, 0, 0)),         # b2
    ]
    args = [x_p, mask3, packed["w1"], packed["b1"], packed["w2"], packed["b2"]]
    if has_down:
        in_specs += [pl.BlockSpec((cp, cp), lambda i: (0, 0)),  # downsample w
                     pl.BlockSpec((1, cp), lambda i: (0, 0))]   # downsample b
        args += [packed["wd"], packed["bd"]]

    vmem_limit = int(min(96 << 20, max(32 << 20, int(1.5 * vmem_estimate(bt)))))

    out = pl.pallas_call(
        kernel,
        out_shape=jax.ShapeDtypeStruct((B_pad, 1, cp), jnp.float32),
        grid=(B_pad // bt,),
        in_specs=in_specs,
        out_specs=pl.BlockSpec((bt, 1, cp), lambda i: (i, 0, 0)),
        compiler_params=pltpu.CompilerParams(
            dimension_semantics=("parallel",),
            vmem_limit_bytes=vmem_limit),
    )(*args)
    return out[:B, 0, :packed["hidden_dim"]]


# ------------------------------ parameters ------------------------------------

def init_tcn_params(key, input_dim, hidden_dim, max_seq_length, kernel_size):
    # Same depth formula as TCNLayer.__init__ (hidden_dim given as int).
    num_levels = int(math.ceil(math.log(max_seq_length / 2) / math.log(kernel_size)))
    channels = [hidden_dim] * num_levels
    params = []
    for i in range(num_levels):
        cin = input_dim if i == 0 else channels[i - 1]
        cout = channels[i]
        key, k1, k2, k3, k4, k5, k6 = jax.random.split(key, 7)
        p = {
            # effective (post weight_norm) conv weights, N(0, 0.01) like init_weights
            "w1": 0.01 * jax.random.normal(k1, (kernel_size, cin, cout), jnp.float32),
            "b1": 0.01 * jax.random.normal(k2, (1, cout), jnp.float32),
            "w2": 0.01 * jax.random.normal(k3, (kernel_size, cout, cout), jnp.float32),
            "b2": 0.01 * jax.random.normal(k4, (1, cout), jnp.float32),
            "dilation": 2 ** i,
        }
        if cin != cout:
            p["wd"] = 0.01 * jax.random.normal(k5, (cin, cout), jnp.float32)
            p["bd"] = 0.01 * jax.random.normal(k6, (1, cout), jnp.float32)
        else:
            p["wd"] = None
            p["bd"] = None
        params.append(p)
    return params


# ------------------------------ pure-JAX reference ----------------------------
# Matmuls mimic the kernel's MXU precision (bf16 inputs, f32 accumulation) so
# the comparison isolates kernel bugs rather than bf16 rounding.

def _ref_block(x, p):
    d = p["dilation"]
    K = p["w1"].shape[0]
    B, T, _ = x.shape

    def causal(h, w, b):
        out = jnp.zeros((B, T, w.shape[-1]), jnp.float32) + b
        for k in range(K):
            shift = (K - 1 - k) * d
            hk = jnp.pad(h, ((0, 0), (shift, 0), (0, 0)))[:, :T, :] if shift else h
            out = out + jnp.einsum("btc,cd->btd",
                                   hk.astype(jnp.bfloat16), w[k].astype(jnp.bfloat16),
                                   preferred_element_type=jnp.float32)
        return out

    h1 = jax.nn.relu(causal(x, p["w1"], p["b1"]))
    h2 = jax.nn.relu(causal(h1, p["w2"], p["b2"]))
    if p["wd"] is None:
        res = x
    else:
        res = jnp.einsum("btc,cd->btd", x.astype(jnp.bfloat16),
                         p["wd"].astype(jnp.bfloat16),
                         preferred_element_type=jnp.float32) + p["bd"]
    return jax.nn.relu(h2 + res)


def tcn_reference(params, x, mask):
    h = x.astype(jnp.float32)
    for p in params:
        h = _ref_block(h, p)
    idx = jnp.sum(mask.astype(jnp.int32), axis=1) - 1
    return h[jnp.arange(h.shape[0]), idx, :]


# ------------------------------ main -------------------------------------------

if __name__ == "__main__":
    B, T, input_dim, hidden_dim = 2, 8, 8, 32
    max_seq_length, kernel_size = 10, 2

    key = jax.random.PRNGKey(0)
    kx, kp = jax.random.split(key)
    x = jax.random.normal(kx, (B, T, input_dim), jnp.float32)
    lengths = jnp.array([T, T - 3], jnp.int32)
    mask = (jnp.arange(T)[None, :] < lengths[:, None]).astype(jnp.float32)

    params = init_tcn_params(kp, input_dim, hidden_dim, max_seq_length, kernel_size)
    packed = pack_tcn_params(params, input_dim)

    out = jax.block_until_ready(tcn_forward(packed, x, mask))   # [B, hidden_dim]

    ref = tcn_reference(params, x, mask)
    np.testing.assert_allclose(np.asarray(out), np.asarray(ref),
                               rtol=1e-3, atol=1e-4)
    assert out.shape == (B, hidden_dim)
    print("KERNEL_OK")
</pallas_src>

<mosaic_0001>
module attributes {stable_mosaic.version = 11 : i64} {
  func.func @_tcn_fused_kernel(%arg0: i32, %arg1: memref<2x8x128xbf16, #tpu.memory_space<vmem>>, %arg2: memref<2x1x8xf32, #tpu.memory_space<vmem>>, %arg3: memref<3x256x128xbf16, #tpu.memory_space<vmem>>, %arg4: memref<3x1x128xf32, #tpu.memory_space<vmem>>, %arg5: memref<3x256x128xbf16, #tpu.memory_space<vmem>>, %arg6: memref<3x1x128xf32, #tpu.memory_space<vmem>>, %arg7: memref<128x128xbf16, #tpu.memory_space<vmem>>, %arg8: memref<1x128xf32, #tpu.memory_space<vmem>>, %arg9: memref<2x1x128xf32, #tpu.memory_space<vmem>>) attributes {dimension_semantics = [#tpu.dimension_semantics<parallel>], iteration_bounds = array<i64: 1>, scalar_prefetch = 0 : i64, scratch_operands = 0 : i64, tpu.core_type = #tpu.core_type<tc>, window_params = [{transform_indices = @transform_0, window_bounds = array<i64: 2, 8, 128>}, {transform_indices = @transform_1, window_bounds = array<i64: 2, 1, 8>}, {pipeline_mode = #tpu.pipeline_mode<synchronous>, transform_indices = @transform_2, window_bounds = array<i64: 3, 256, 128>}, {pipeline_mode = #tpu.pipeline_mode<synchronous>, transform_indices = @transform_3, window_bounds = array<i64: 3, 1, 128>}, {pipeline_mode = #tpu.pipeline_mode<synchronous>, transform_indices = @transform_4, window_bounds = array<i64: 3, 256, 128>}, {pipeline_mode = #tpu.pipeline_mode<synchronous>, transform_indices = @transform_5, window_bounds = array<i64: 3, 1, 128>}, {pipeline_mode = #tpu.pipeline_mode<synchronous>, transform_indices = @transform_6, window_bounds = array<i64: 128, 128>}, {pipeline_mode = #tpu.pipeline_mode<synchronous>, transform_indices = @transform_7, window_bounds = array<i64: 1, 128>}, {transform_indices = @transform_8, window_bounds = array<i64: 2, 1, 128>}]} {
    %c0 = arith.constant 0 : index
    %c0_0 = arith.constant 0 : index
    %c0_1 = arith.constant 0 : index
    %0 = vector.load %arg1[%c0, %c0_0, %c0_1] : memref<2x8x128xbf16, #tpu.memory_space<vmem>>, vector<2x8x128xbf16>
    %1 = vector.shape_cast %0 : vector<2x8x128xbf16> to vector<16x128xbf16>
    %2 = arith.extf %1 : vector<16x128xbf16> to vector<16x128xf32>
    %3 = tpu.iota {dimensions = array<i32: 0>} : vector<16x1xi32>
    %c8_i32 = arith.constant 8 : i32
    %c0_i32 = arith.constant 0 : i32
    %4 = arith.cmpi eq, %c8_i32, %c0_i32 : i32
    %c1_i32 = arith.constant 1 : i32
    %5 = arith.select %4, %c1_i32, %c8_i32 : i32
    %6 = vector.broadcast %5 : i32 to vector<16x1xi32>
    %7 = arith.remsi %3, %6 : vector<16x1xi32>
    %c0_i32_2 = arith.constant 0 : i32
    %8 = vector.broadcast %c0_i32_2 : i32 to vector<16x1xi32>
    %9 = arith.cmpi ne, %7, %8 : vector<16x1xi32>
    %c0_i32_3 = arith.constant 0 : i32
    %10 = vector.broadcast %c0_i32_3 : i32 to vector<16x1xi32>
    %11 = arith.cmpi slt, %7, %10 : vector<16x1xi32>
    %c0_i32_4 = arith.constant 0 : i32
    %12 = arith.cmpi slt, %5, %c0_i32_4 : i32
    %13 = vector.broadcast %12 : i1 to vector<16x1xi1>
    %14 = vector.broadcast %13 : vector<16x1xi1> to vector<16x1xi1>
    %15 = arith.xori %11, %14 : vector<16x1xi1>
    %16 = arith.andi %15, %9 : vector<16x1xi1>
    %17 = vector.broadcast %5 : i32 to vector<16x1xi32>
    %18 = arith.addi %7, %17 : vector<16x1xi32>
    %19 = arith.select %16, %18, %7 : vector<16x1xi1>, vector<16x1xi32>
    %c1_i32_5 = arith.constant 1 : i32
    %20 = vector.broadcast %c1_i32_5 : i32 to vector<16x1xi32>
    %21 = arith.cmpi sge, %19, %20 : vector<16x1xi32>
    %22 = arith.truncf %2 : vector<16x128xf32> to vector<16x128xbf16>
    %c1_i32_6 = arith.constant 1 : i32
    %23 = tpu.dynamic_rotate %2 by %c1_i32_6 dim 0 : vector<16x128xf32>, i32 -> vector<16x128xf32>
    %cst = arith.constant 0.000000e+00 : f32
    %24 = vector.shape_cast %21 : vector<16x1xi1> to vector<16x1xi1>
    %25 = vector.broadcast %24 : vector<16x1xi1> to vector<16x128xi1>
    %26 = vector.broadcast %cst : f32 to vector<16x128xf32>
    %27 = arith.select %25, %23, %26 : vector<16x128xi1>, vector<16x128xf32>
    %28 = arith.truncf %27 : vector<16x128xf32> to vector<16x128xbf16>
    %29 = tpu.concatenate %28, %22 in 1 : vector<16x128xbf16>, vector<16x128xbf16> -> vector<16x256xbf16>
    %c0_7 = arith.constant 0 : index
    %c0_8 = arith.constant 0 : index
    %c0_9 = arith.constant 0 : index
    %30 = vector.load %arg3[%c0_7, %c0_8, %c0_9] : memref<3x256x128xbf16, #tpu.memory_space<vmem>>, vector<1x256x128xbf16>
    %31 = vector.shape_cast %30 : vector<1x256x128xbf16> to vector<256x128xbf16>
    %cst_10 = arith.constant dense<0.000000e+00> : vector<16x128xf32>
    %32 = tpu.matmul %29, %31, %cst_10 {dimension_numbers = #tpu.dot_dimension_numbers<[1], [0], [0], [1], [0, 0, 1, 1], [], []>} : vector<16x256xbf16>, vector<256x128xbf16>, vector<16x128xf32> -> vector<16x128xf32>
    %c0_11 = arith.constant 0 : index
    %c0_12 = arith.constant 0 : index
    %c0_13 = arith.constant 0 : index
    %33 = vector.load %arg4[%c0_11, %c0_12, %c0_13] : memref<3x1x128xf32, #tpu.memory_space<vmem>>, vector<1x1x128xf32>
    %34 = vector.shape_cast %33 : vector<1x1x128xf32> to vector<1x128xf32>
    %35 = vector.broadcast %34 : vector<1x128xf32> to vector<16x128xf32>
    %36 = arith.addf %32, %35 : vector<16x128xf32>
    %cst_14 = arith.constant 0.000000e+00 : f32
    %37 = vector.broadcast %cst_14 : f32 to vector<16x128xf32>
    %38 = arith.maximumf %36, %37 : vector<16x128xf32>
    %39 = arith.truncf %38 : vector<16x128xf32> to vector<16x128xbf16>
    %c1_i32_15 = arith.constant 1 : i32
    %40 = tpu.dynamic_rotate %38 by %c1_i32_15 dim 0 : vector<16x128xf32>, i32 -> vector<16x128xf32>
    %cst_16 = arith.constant 0.000000e+00 : f32
    %41 = vector.shape_cast %21 : vector<16x1xi1> to vector<16x1xi1>
    %42 = vector.broadcast %41 : vector<16x1xi1> to vector<16x128xi1>
    %43 = vector.broadcast %cst_16 : f32 to vector<16x128xf32>
    %44 = arith.select %42, %40, %43 : vector<16x128xi1>, vector<16x128xf32>
    %45 = arith.truncf %44 : vector<16x128xf32> to vector<16x128xbf16>
    %46 = tpu.concatenate %45, %39 in 1 : vector<16x128xbf16>, vector<16x128xbf16> -> vector<16x256xbf16>
    %c0_17 = arith.constant 0 : index
    %c0_18 = arith.constant 0 : index
    %c0_19 = arith.constant 0 : index
    %47 = vector.load %arg5[%c0_17, %c0_18, %c0_19] : memref<3x256x128xbf16, #tpu.memory_space<vmem>>, vector<1x256x128xbf16>
    %48 = vector.shape_cast %47 : vector<1x256x128xbf16> to vector<256x128xbf16>
    %cst_20 = arith.constant dense<0.000000e+00> : vector<16x128xf32>
    %49 = tpu.matmul %46, %48, %cst_20 {dimension_numbers = #tpu.dot_dimension_numbers<[1], [0], [0], [1], [0, 0, 1, 1], [], []>} : vector<16x256xbf16>, vector<256x128xbf16>, vector<16x128xf32> -> vector<16x128xf32>
    %c0_21 = arith.constant 0 : index
    %c0_22 = arith.constant 0 : index
    %c0_23 = arith.constant 0 : index
    %50 = vector.load %arg6[%c0_21, %c0_22, %c0_23] : memref<3x1x128xf32, #tpu.memory_space<vmem>>, vector<1x1x128xf32>
    %51 = vector.shape_cast %50 : vector<1x1x128xf32> to vector<1x128xf32>
    %52 = vector.broadcast %51 : vector<1x128xf32> to vector<16x128xf32>
    %53 = arith.addf %49, %52 : vector<16x128xf32>
    %cst_24 = arith.constant 0.000000e+00 : f32
    %54 = vector.broadcast %cst_24 : f32 to vector<16x128xf32>
    %55 = arith.maximumf %53, %54 : vector<16x128xf32>
    %c0_25 = arith.constant 0 : index
    %c0_26 = arith.constant 0 : index
    %56 = vector.load %arg7[%c0_25, %c0_26] : memref<128x128xbf16, #tpu.memory_space<vmem>>, vector<128x128xbf16>
    %cst_27 = arith.constant dense<0.000000e+00> : vector<16x128xf32>
    %57 = tpu.matmul %22, %56, %cst_27 {dimension_numbers = #tpu.dot_dimension_numbers<[1], [0], [0], [1], [0, 0, 1, 1], [], []>} : vector<16x128xbf16>, vector<128x128xbf16>, vector<16x128xf32> -> vector<16x128xf32>
    %c0_28 = arith.constant 0 : index
    %c0_29 = arith.constant 0 : index
    %58 = vector.load %arg8[%c0_28, %c0_29] : memref<1x128xf32, #tpu.memory_space<vmem>>, vector<1x128xf32>
    %59 = vector.broadcast %58 : vector<1x128xf32> to vector<16x128xf32>
    %60 = arith.addf %57, %59 : vector<16x128xf32>
    %61 = arith.addf %55, %60 : vector<16x128xf32>
    %cst_30 = arith.constant 0.000000e+00 : f32
    %62 = vector.broadcast %cst_30 : f32 to vector<16x128xf32>
    %63 = arith.maximumf %61, %62 : vector<16x128xf32>
    %c2_i32 = arith.constant 2 : i32
    %64 = vector.broadcast %c2_i32 : i32 to vector<16x1xi32>
    %65 = arith.cmpi sge, %19, %64 : vector<16x1xi32>
    %66 = arith.truncf %63 : vector<16x128xf32> to vector<16x128xbf16>
    %c2_i32_31 = arith.constant 2 : i32
    %67 = tpu.dynamic_rotate %63 by %c2_i32_31 dim 0 : vector<16x128xf32>, i32 -> vector<16x128xf32>
    %cst_32 = arith.constant 0.000000e+00 : f32
    %68 = vector.shape_cast %65 : vector<16x1xi1> to vector<16x1xi1>
    %69 = vector.broadcast %68 : vector<16x1xi1> to vector<16x128xi1>
    %70 = vector.broadcast %cst_32 : f32 to vector<16x128xf32>
    %71 = arith.select %69, %67, %70 : vector<16x128xi1>, vector<16x128xf32>
    %72 = arith.truncf %71 : vector<16x128xf32> to vector<16x128xbf16>
    %73 = tpu.concatenate %72, %66 in 1 : vector<16x128xbf16>, vector<16x128xbf16> -> vector<16x256xbf16>
    %c1 = arith.constant 1 : index
    %c0_33 = arith.constant 0 : index
    %c0_34 = arith.constant 0 : index
    %74 = vector.load %arg3[%c1, %c0_33, %c0_34] : memref<3x256x128xbf16, #tpu.memory_space<vmem>>, vector<1x256x128xbf16>
    %75 = vector.shape_cast %74 : vector<1x256x128xbf16> to vector<256x128xbf16>
    %cst_35 = arith.constant dense<0.000000e+00> : vector<16x128xf32>
    %76 = tpu.matmul %73, %75, %cst_35 {dimension_numbers = #tpu.dot_dimension_numbers<[1], [0], [0], [1], [0, 0, 1, 1], [], []>} : vector<16x256xbf16>, vector<256x128xbf16>, vector<16x128xf32> -> vector<16x128xf32>
    %c1_36 = arith.constant 1 : index
    %c0_37 = arith.constant 0 : index
    %c0_38 = arith.constant 0 : index
    %77 = vector.load %arg4[%c1_36, %c0_37, %c0_38] : memref<3x1x128xf32, #tpu.memory_space<vmem>>, vector<1x1x128xf32>
    %78 = vector.shape_cast %77 : vector<1x1x128xf32> to vector<1x128xf32>
    %79 = vector.broadcast %78 : vector<1x128xf32> to vector<16x128xf32>
    %80 = arith.addf %76, %79 : vector<16x128xf32>
    %cst_39 = arith.constant 0.000000e+00 : f32
    %81 = vector.broadcast %cst_39 : f32 to vector<16x128xf32>
    %82 = arith.maximumf %80, %81 : vector<16x128xf32>
    %83 = arith.truncf %82 : vector<16x128xf32> to vector<16x128xbf16>
    %c2_i32_40 = arith.constant 2 : i32
    %84 = tpu.dynamic_rotate %82 by %c2_i32_40 dim 0 : vector<16x128xf32>, i32 -> vector<16x128xf32>
    %cst_41 = arith.constant 0.000000e+00 : f32
    %85 = vector.shape_cast %65 : vector<16x1xi1> to vector<16x1xi1>
    %86 = vector.broadcast %85 : vector<16x1xi1> to vector<16x128xi1>
    %87 = vector.broadcast %cst_41 : f32 to vector<16x128xf32>
    %88 = arith.select %86, %84, %87 : vector<16x128xi1>, vector<16x128xf32>
    %89 = arith.truncf %88 : vector<16x128xf32> to vector<16x128xbf16>
    %90 = tpu.concatenate %89, %83 in 1 : vector<16x128xbf16>, vector<16x128xbf16> -> vector<16x256xbf16>
    %c1_42 = arith.constant 1 : index
    %c0_43 = arith.constant 0 : index
    %c0_44 = arith.constant 0 : index
    %91 = vector.load %arg5[%c1_42, %c0_43, %c0_44] : memref<3x256x128xbf16, #tpu.memory_space<vmem>>, vector<1x256x128xbf16>
    %92 = vector.shape_cast %91 : vector<1x256x128xbf16> to vector<256x128xbf16>
    %cst_45 = arith.constant dense<0.000000e+00> : vector<16x128xf32>
    %93 = tpu.matmul %90, %92, %cst_45 {dimension_numbers = #tpu.dot_dimension_numbers<[1], [0], [0], [1], [0, 0, 1, 1], [], []>} : vector<16x256xbf16>, vector<256x128xbf16>, vector<16x128xf32> -> vector<16x128xf32>
    %c1_46 = arith.constant 1 : index
    %c0_47 = arith.constant 0 : index
    %c0_48 = arith.constant 0 : index
    %94 = vector.load %arg6[%c1_46, %c0_47, %c0_48] : memref<3x1x128xf32, #tpu.memory_space<vmem>>, vector<1x1x128xf32>
    %95 = vector.shape_cast %94 : vector<1x1x128xf32> to vector<1x128xf32>
    %96 = vector.broadcast %95 : vector<1x128xf32> to vector<16x128xf32>
    %97 = arith.addf %93, %96 : vector<16x128xf32>
    %cst_49 = arith.constant 0.000000e+00 : f32
    %98 = vector.broadcast %cst_49 : f32 to vector<16x128xf32>
    %99 = arith.maximumf %97, %98 : vector<16x128xf32>
    %100 = arith.addf %99, %63 : vector<16x128xf32>
    %cst_50 = arith.constant 0.000000e+00 : f32
    %101 = vector.broadcast %cst_50 : f32 to vector<16x128xf32>
    %102 = arith.maximumf %100, %101 : vector<16x128xf32>
    %c4_i32 = arith.constant 4 : i32
    %103 = vector.broadcast %c4_i32 : i32 to vector<16x1xi32>
    %104 = arith.cmpi sge, %19, %103 : vector<16x1xi32>
    %105 = arith.truncf %102 : vector<16x128xf32> to vector<16x128xbf16>
    %c4_i32_51 = arith.constant 4 : i32
    %106 = tpu.dynamic_rotate %102 by %c4_i32_51 dim 0 : vector<16x128xf32>, i32 -> vector<16x128xf32>
    %cst_52 = arith.constant 0.000000e+00 : f32
    %107 = vector.shape_cast %104 : vector<16x1xi1> to vector<16x1xi1>
    %108 = vector.broadcast %107 : vector<16x1xi1> to vector<16x128xi1>
    %109 = vector.broadcast %cst_52 : f32 to vector<16x128xf32>
    %110 = arith.select %108, %106, %109 : vector<16x128xi1>, vector<16x128xf32>
    %111 = arith.truncf %110 : vector<16x128xf32> to vector<16x128xbf16>
    %112 = tpu.concatenate %111, %105 in 1 : vector<16x128xbf16>, vector<16x128xbf16> -> vector<16x256xbf16>
    %c2 = arith.constant 2 : index
    %c0_53 = arith.constant 0 : index
    %c0_54 = arith.constant 0 : index
    %113 = vector.load %arg3[%c2, %c0_53, %c0_54] : memref<3x256x128xbf16, #tpu.memory_space<vmem>>, vector<1x256x128xbf16>
    %114 = vector.shape_cast %113 : vector<1x256x128xbf16> to vector<256x128xbf16>
    %cst_55 = arith.constant dense<0.000000e+00> : vector<16x128xf32>
    %115 = tpu.matmul %112, %114, %cst_55 {dimension_numbers = #tpu.dot_dimension_numbers<[1], [0], [0], [1], [0, 0, 1, 1], [], []>} : vector<16x256xbf16>, vector<256x128xbf16>, vector<16x128xf32> -> vector<16x128xf32>
    %c2_56 = arith.constant 2 : index
    %c0_57 = arith.constant 0 : index
    %c0_58 = arith.constant 0 : index
    %116 = vector.load %arg4[%c2_56, %c0_57, %c0_58] : memref<3x1x128xf32, #tpu.memory_space<vmem>>, vector<1x1x128xf32>
    %117 = vector.shape_cast %116 : vector<1x1x128xf32> to vector<1x128xf32>
    %118 = vector.broadcast %117 : vector<1x128xf32> to vector<16x128xf32>
    %119 = arith.addf %115, %118 : vector<16x128xf32>
    %cst_59 = arith.constant 0.000000e+00 : f32
    %120 = vector.broadcast %cst_59 : f32 to vector<16x128xf32>
    %121 = arith.maximumf %119, %120 : vector<16x128xf32>
    %122 = arith.truncf %121 : vector<16x128xf32> to vector<16x128xbf16>
    %c4_i32_60 = arith.constant 4 : i32
    %123 = tpu.dynamic_rotate %121 by %c4_i32_60 dim 0 : vector<16x128xf32>, i32 -> vector<16x128xf32>
    %cst_61 = arith.constant 0.000000e+00 : f32
    %124 = vector.shape_cast %104 : vector<16x1xi1> to vector<16x1xi1>
    %125 = vector.broadcast %124 : vector<16x1xi1> to vector<16x128xi1>
    %126 = vector.broadcast %cst_61 : f32 to vector<16x128xf32>
    %127 = arith.select %125, %123, %126 : vector<16x128xi1>, vector<16x128xf32>
    %128 = arith.truncf %127 : vector<16x128xf32> to vector<16x128xbf16>
    %129 = tpu.concatenate %128, %122 in 1 : vector<16x128xbf16>, vector<16x128xbf16> -> vector<16x256xbf16>
    %c2_62 = arith.constant 2 : index
    %c0_63 = arith.constant 0 : index
    %c0_64 = arith.constant 0 : index
    %130 = vector.load %arg5[%c2_62, %c0_63, %c0_64] : memref<3x256x128xbf16, #tpu.memory_space<vmem>>, vector<1x256x128xbf16>
    %131 = vector.shape_cast %130 : vector<1x256x128xbf16> to vector<256x128xbf16>
    %cst_65 = arith.constant dense<0.000000e+00> : vector<16x128xf32>
    %132 = tpu.matmul %129, %131, %cst_65 {dimension_numbers = #tpu.dot_dimension_numbers<[1], [0], [0], [1], [0, 0, 1, 1], [], []>} : vector<16x256xbf16>, vector<256x128xbf16>, vector<16x128xf32> -> vector<16x128xf32>
    %c2_66 = arith.constant 2 : index
    %c0_67 = arith.constant 0 : index
    %c0_68 = arith.constant 0 : index
    %133 = vector.load %arg6[%c2_66, %c0_67, %c0_68] : memref<3x1x128xf32, #tpu.memory_space<vmem>>, vector<1x1x128xf32>
    %134 = vector.shape_cast %133 : vector<1x1x128xf32> to vector<1x128xf32>
    %135 = vector.broadcast %134 : vector<1x128xf32> to vector<16x128xf32>
    %136 = arith.addf %132, %135 : vector<16x128xf32>
    %cst_69 = arith.constant 0.000000e+00 : f32
    %137 = vector.broadcast %cst_69 : f32 to vector<16x128xf32>
    %138 = arith.maximumf %136, %137 : vector<16x128xf32>
    %139 = arith.addf %138, %102 : vector<16x128xf32>
    %cst_70 = arith.constant 0.000000e+00 : f32
    %140 = vector.broadcast %cst_70 : f32 to vector<16x128xf32>
    %141 = arith.maximumf %139, %140 : vector<16x128xf32>
    %c0_71 = arith.constant 0 : index
    %c0_72 = arith.constant 0 : index
    %c0_73 = arith.constant 0 : index
    %142 = vector.load %arg2[%c0_71, %c0_72, %c0_73] : memref<2x1x8xf32, #tpu.memory_space<vmem>>, vector<2x1x8xf32>
    %cst_74 = arith.constant dense<0.000000e+00> : vector<2x1xf32>
    %143 = vector.multi_reduction <add>, %142, %cst_74 [2] : vector<2x1x8xf32> to vector<2x1xf32>
    %144 = vector.shape_cast %143 : vector<2x1xf32> to vector<2x1x1xf32>
    %145 = arith.fptosi %144 : vector<2x1x1xf32> to vector<2x1x1xi32>
    %c0_i32_75 = arith.constant 0 : i32
    %146 = vector.broadcast %c0_i32_75 : i32 to vector<2x1x1xi32>
    %147 = arith.cmpi sgt, %145, %146 : vector<2x1x1xi32>
    %c1_i32_76 = arith.constant 1 : i32
    %148 = vector.broadcast %c1_i32_76 : i32 to vector<2x1x1xi32>
    %149 = arith.subi %145, %148 : vector<2x1x1xi32>
    %c7_i32 = arith.constant 7 : i32
    %150 = vector.broadcast %c7_i32 : i32 to vector<2x1x1xi32>
    %151 = arith.select %147, %149, %150 : vector<2x1x1xi1>, vector<2x1x1xi32>
    %152 = tpu.iota {dimensions = array<i32: 1>} : vector<2x8x1xi32>
    %153 = vector.broadcast %151 : vector<2x1x1xi32> to vector<2x8x1xi32>
    %154 = arith.cmpi eq, %152, %153 : vector<2x8x1xi32>
    %155 = arith.extui %154 : vector<2x8x1xi1> to vector<2x8x1xi32>
    %156 = arith.sitofp %155 : vector<2x8x1xi32> to vector<2x8x1xf32>
    %157 = vector.shape_cast %141 : vector<16x128xf32> to vector<2x8x128xf32>
    %158 = vector.broadcast %156 : vector<2x8x1xf32> to vector<2x8x128xf32>
    %159 = arith.mulf %157, %158 : vector<2x8x128xf32>
    %cst_77 = arith.constant dense<0.000000e+00> : vector<2x128xf32>
    %160 = vector.multi_reduction <add>, %159, %cst_77 [1] : vector<2x8x128xf32> to vector<2x128xf32>
    %161 = vector.shape_cast %160 : vector<2x128xf32> to vector<2x1x128xf32>
    %c0_78 = arith.constant 0 : index
    %c0_79 = arith.constant 0 : index
    %c0_80 = arith.constant 0 : index
    %162 = vector.load %arg9[%c0_78, %c0_79, %c0_80] : memref<2x1x128xf32, #tpu.memory_space<vmem>>, vector<2x1x128xf32>
    tpu.vector_store %arg9[%c0_78, %c0_79, %c0_80], %161 {strides = array<i32>} : memref<2x1x128xf32, #tpu.memory_space<vmem>>, vector<2x1x128xf32>,
    return
  }
  func.func @transform_0(%arg0: i32) -> (i32, i32, i32) {
    %c0_i32 = arith.constant 0 : i32
    %c0_i32_0 = arith.constant 0 : i32
    %c0_i32_1 = arith.constant 0 : i32
    return %arg0, %c0_i32, %c0_i32_0 : i32, i32, i32
  }
  func.func @transform_1(%arg0: i32) -> (i32, i32, i32) {
    %c0_i32 = arith.constant 0 : i32
    %c0_i32_0 = arith.constant 0 : i32
    %c0_i32_1 = arith.constant 0 : i32
    return %arg0, %c0_i32, %c0_i32_0 : i32, i32, i32
  }
  func.func @transform_2(%arg0: i32) -> (i32, i32, i32) {
    %c0_i32 = arith.constant 0 : i32
    %c0_i32_0 = arith.constant 0 : i32
    %c0_i32_1 = arith.constant 0 : i32
    %c0_i32_2 = arith.constant 0 : i32
    return %c0_i32, %c0_i32_0, %c0_i32_1 : i32, i32, i32
  }
  func.func @transform_3(%arg0: i32) -> (i32, i32, i32) {
    %c0_i32 = arith.constant 0 : i32
    %c0_i32_0 = arith.constant 0 : i32
    %c0_i32_1 = arith.constant 0 : i32
    %c0_i32_2 = arith.constant 0 : i32
    return %c0_i32, %c0_i32_0, %c0_i32_1 : i32, i32, i32
  }
  func.func @transform_4(%arg0: i32) -> (i32, i32, i32) {
    %c0_i32 = arith.constant 0 : i32
    %c0_i32_0 = arith.constant 0 : i32
    %c0_i32_1 = arith.constant 0 : i32
    %c0_i32_2 = arith.constant 0 : i32
    return %c0_i32, %c0_i32_0, %c0_i32_1 : i32, i32, i32
  }
  func.func @transform_5(%arg0: i32) -> (i32, i32, i32) {
    %c0_i32 = arith.constant 0 : i32
    %c0_i32_0 = arith.constant 0 : i32
    %c0_i32_1 = arith.constant 0 : i32
    %c0_i32_2 = arith.constant 0 : i32
    return %c0_i32, %c0_i32_0, %c0_i32_1 : i32, i32, i32
  }
  func.func @transform_6(%arg0: i32) -> (i32, i32) {
    %c0_i32 = arith.constant 0 : i32
    %c0_i32_0 = arith.constant 0 : i32
    %c0_i32_1 = arith.constant 0 : i32
    return %c0_i32, %c0_i32_0 : i32, i32
  }
  func.func @transform_7(%arg0: i32) -> (i32, i32) {
    %c0_i32 = arith.constant 0 : i32
    %c0_i32_0 = arith.constant 0 : i32
    %c0_i32_1 = arith.constant 0 : i32
    return %c0_i32, %c0_i32_0 : i32, i32
  }
  func.func @transform_8(%arg0: i32) -> (i32, i32, i32) {
    %c0_i32 = arith.constant 0 : i32
    %c0_i32_0 = arith.constant 0 : i32
    %c0_i32_1 = arith.constant 0 : i32
    return %arg0, %c0_i32, %c0_i32_0 : i32, i32, i32
  }
}

</mosaic_0001>

<llo_original>
// kernel: tpu_custom_call.1
$region0: #{tpu_custom_call.1}
  #allocation0 [shape = 'u32[]', space=smem, size = 0x4, offset = 0x4, fixed_abs, tag = 'smem constant byte address 0x4 - core index']
  #allocation1 [shape = 'u32[144,128]{1,0:T(1,128)}', space=vmem, size = 0x12000, scoped, tag = 'internal scratch']
  %s0 = inlined_call_operand.hbm [shape: bf16[2,8,128], index: 0, kind: input, shape index: {}]
  %s1 = inlined_call_operand.hbm [shape: f32[2,1,8], index: 1, kind: input, shape index: {}]
  %s2 = inlined_call_operand.hbm [shape: bf16[3,256,128], index: 2, kind: input, shape index: {}]
  %s3 = inlined_call_operand.vmem [shape: f32[3,1,128], index: 3, kind: input, shape index: {}]
  %s4 = inlined_call_operand.hbm [shape: bf16[3,256,128], index: 4, kind: input, shape index: {}]
  %s5 = inlined_call_operand.vmem [shape: f32[3,1,128], index: 5, kind: input, shape index: {}]
  %s6 = inlined_call_operand.hbm [shape: bf16[128,128], index: 6, kind: input, shape index: {}]
  %s7 = inlined_call_operand.vmem [shape: f32[1,128], index: 7, kind: input, shape index: {}]
  %s8 = inlined_call_operand.hbm [shape: f32[2,1,128], index: 8, kind: output, shape index: {}]
  %s9 = sld [smem:[#allocation0]]
  $region62: #{tpu_custom_call.1} parent=0
    _
  %s11 = ssub.s32 1, %s9
  %s12 = scalar_select 0, %s11, %s9
  $region1: #{tpu_custom_call.1} parent=0
    #allocation2 [shape = 'u8[4096]{0}', space=vmem, size = 0x1000, scoped, tag = 'input window, operand 0, single buffered']
    #allocation3 [shape = 's32[1]{0}', space=sflag, size = 0x4, scoped, tag = 'scoped memory for tpu_custom_call.1']
    #allocation4 [shape = 's32[1]{0}', space=sflag, size = 0x4, scoped, tag = 'scoped memory for tpu_custom_call.1']
    #allocation5 [shape = 'u8[1024]{0}', space=vmem, size = 0x400, scoped, tag = 'input window, operand 1, single buffered']
    #allocation6 [shape = 's32[1]{0}', space=sflag, size = 0x4, scoped, tag = 'scoped memory for tpu_custom_call.1']
    #allocation7 [shape = 'u8[196608]{0}', space=vmem, size = 0x30000, scoped, tag = 'input window, operand 2, single buffered']
    #allocation8 [shape = 'u8[196608]{0}', space=vmem, size = 0x30000, scoped, tag = 'input window, operand 4, single buffered']
    #allocation9 [shape = 's32[1]{0}', space=sflag, size = 0x4, scoped, tag = 'scoped memory for tpu_custom_call.1']
    #allocation10 [shape = 'u8[32768]{0}', space=vmem, size = 0x8000, scoped, tag = 'input window, operand 6, single buffered']
    #allocation11 [shape = 'u8[1024]{0}', space=vmem, size = 0x400, scoped, tag = 'output window, operand 0, single buffered']
    %13 = vsyncpa [#allocation3], 0
    %14 = vsyncpa [#allocation6], 0
    %15 = vsyncpa [#allocation9], 0
    %16 = vsyncpa [#allocation4], 0
    // Predicated region
    $region2: #{tpu_custom_call.1} parent=1 // pred_check
      _
    $region3: #{tpu_custom_call.1} parent=1 // pred_check_branch
      %18 = sbr.rel (0) target = $region5
    $region4: #{tpu_custom_call.1} parent=1 // pred_region
      %s20 = ssub.s32 128, 128
      %21 = vsyncadd [#allocation3], %s20
      %s22 = sshll.u32 [#allocation2], 4
      %s23 = int_to_ptr.vmem [resolvable:$true] %s22
      %28 = dma.hbm_to_vmem [thread:$0]  %s0, 128, %s23, [#allocation3], 64, 64, 4
    $region5: #{tpu_custom_call.1} parent=1 // pred_fallthru
      _
    // Predicated region
    $region6: #{tpu_custom_call.1} parent=1 // pred_check
      _
    $region7: #{tpu_custom_call.1} parent=1 // pred_check_branch
      %30 = sbr.rel (0) target = $region9
    $region8: #{tpu_custom_call.1} parent=1 // pred_region
      %s32 = ssub.s32 32, 32
      %33 = vsyncadd [#allocation6], %s32
      %s34 = sshll.u32 [#allocation5], 4
      %s35 = int_to_ptr.vmem [resolvable:$true] %s34
      %40 = dma.hbm_to_vmem [thread:$0]  %s1, 32, %s35, [#allocation6], 16, 16, 1
    $region9: #{tpu_custom_call.1} parent=1 // pred_fallthru
      _
    // Predicated region
    $region10: #{tpu_custom_call.1} parent=1 // pred_check
      _
    $region11: #{tpu_custom_call.1} parent=1 // pred_check_branch
      %42 = sbr.rel (0) target = $region13
    $region12: #{tpu_custom_call.1} parent=1 // pred_region
      %s44 = ssub.s32 6144, 6144
      %45 = vsyncadd [#allocation6], %s44
      %s46 = sshll.u32 [#allocation7], 4
      %s47 = int_to_ptr.vmem [resolvable:$true] %s46
      %52 = dma.hbm_to_vmem [thread:$0]  %s2, 6144, %s47, [#allocation6], 64, 64, 4
    $region13: #{tpu_custom_call.1} parent=1 // pred_fallthru
      _
    // Predicated region
    $region14: #{tpu_custom_call.1} parent=1 // pred_check
      _
    $region15: #{tpu_custom_call.1} parent=1 // pred_check_branch
      %54 = sbr.rel (0) target = $region17
    $region16: #{tpu_custom_call.1} parent=1 // pred_region
      _
    $region17: #{tpu_custom_call.1} parent=1 // pred_fallthru
      _
    // Predicated region
    $region18: #{tpu_custom_call.1} parent=1 // pred_check
      _
    $region19: #{tpu_custom_call.1} parent=1 // pred_check_branch
      %56 = sbr.rel (0) target = $region21
    $region20: #{tpu_custom_call.1} parent=1 // pred_region
      %s58 = ssub.s32 6144, 6144
      %59 = vsyncadd [#allocation9], %s58
      %s60 = sshll.u32 [#allocation8], 4
      %s61 = int_to_ptr.vmem [resolvable:$true] %s60
      %66 = dma.hbm_to_vmem [thread:$0]  %s4, 6144, %s61, [#allocation9], 64, 64, 4
    $region21: #{tpu_custom_call.1} parent=1 // pred_fallthru
      _
    // Predicated region
    $region22: #{tpu_custom_call.1} parent=1 // pred_check
      _
    $region23: #{tpu_custom_call.1} parent=1 // pred_check_branch
      %68 = sbr.rel (0) target = $region25
    $region24: #{tpu_custom_call.1} parent=1 // pred_region
      _
    $region25: #{tpu_custom_call.1} parent=1 // pred_fallthru
      _
    // Predicated region
    $region26: #{tpu_custom_call.1} parent=1 // pred_check
      _
    $region27: #{tpu_custom_call.1} parent=1 // pred_check_branch
      %70 = sbr.rel (0) target = $region29
    $region28: #{tpu_custom_call.1} parent=1 // pred_region
      %s72 = ssub.s32 1024, 1024
      %73 = vsyncadd [#allocation9], %s72
      %s74 = sshll.u32 [#allocation10], 4
      %s75 = int_to_ptr.vmem [resolvable:$true] %s74
      %80 = dma.hbm_to_vmem [thread:$0]  %s6, 1024, %s75, [#allocation9], 64, 64, 4
    $region29: #{tpu_custom_call.1} parent=1 // pred_fallthru
      _
    // Predicated region
    $region30: #{tpu_custom_call.1} parent=1 // pred_check
      _
    $region31: #{tpu_custom_call.1} parent=1 // pred_check_branch
      %82 = sbr.rel (0) target = $region33
    $region32: #{tpu_custom_call.1} parent=1 // pred_region
      _
    $region33: #{tpu_custom_call.1} parent=1 // pred_fallthru
      _
    // Predicated region
    $region34: #{tpu_custom_call.1} parent=1 // pred_check
      _
    $region35: #{tpu_custom_call.1} parent=1 // pred_check_branch
      %84 = sbr.rel (0) target = $region37
    $region36: #{tpu_custom_call.1} parent=1 // pred_region
      %85 = dma.done [#allocation3], 128
    $region37: #{tpu_custom_call.1} parent=1 // pred_fallthru
      _
    // Predicated region
    $region38: #{tpu_custom_call.1} parent=1 // pred_check
      _
    $region39: #{tpu_custom_call.1} parent=1 // pred_check_branch
      %87 = sbr.rel (0) target = $region41
    $region40: #{tpu_custom_call.1} parent=1 // pred_region
      %88 = dma.done [#allocation6], 32
    $region41: #{tpu_custom_call.1} parent=1 // pred_fallthru
      _
    // Predicated region
    $region42: #{tpu_custom_call.1} parent=1 // pred_check
      _
    $region43: #{tpu_custom_call.1} parent=1 // pred_check_branch
      %90 = sbr.rel (0) target = $region45
    $region44: #{tpu_custom_call.1} parent=1 // pred_region
      %91 = dma.done [#allocation6], 6144
    $region45: #{tpu_custom_call.1} parent=1 // pred_fallthru
      _
    // Predicated region
    $region46: #{tpu_custom_call.1} parent=1 // pred_check
      _
    $region47: #{tpu_custom_call.1} parent=1 // pred_check_branch
      %93 = sbr.rel (0) target = $region49
    $region48: #{tpu_custom_call.1} parent=1 // pred_region
      %94 = dma.done [#allocation9], 6144
    $region49: #{tpu_custom_call.1} parent=1 // pred_fallthru
      _
    // Predicated region
    $region50: #{tpu_custom_call.1} parent=1 // pred_check
      _
    $region51: #{tpu_custom_call.1} parent=1 // pred_check_branch
      %96 = sbr.rel (0) target = $region53
    $region52: #{tpu_custom_call.1} parent=1 // pred_region
      %97 = dma.done [#allocation9], 1024
    $region53: #{tpu_custom_call.1} parent=1 // pred_fallthru
      _
    %v99 = vld [vmem:[#allocation2] sm:$0xf]
    %v100 = vld [vmem:[#allocation2 + $0x4] sm:$0xf]
    %v101 = vunpack.c.l.bf16 %v99
    %v102 = vunpack.c.l.bf16 %v100
    %v103 = vlaneseq
    %v104 = vshrl.u32 %v103, 7
    %v105 = vadd.s32 %v104, 8
    %vm106 = vcmp.lt.s32.totalorder %v104, 0
    %v107 = vsub.s32 0, %v104
    %v108 = vsel %vm106, %v107, %v104
    %v109 = vshrl.u32 %v108, 3
    %v110 = vand.u32 %v108, 7
    %v111 = vsub.s32 0, %v110
    %v112 = vsel %vm106, %v111, %v110
    %vm113 = vcmp.lt.s32.totalorder %v105, 0
    %v114 = vsub.s32 0, %v105
    %v115 = vsel %vm113, %v114, %v105
    %v116 = vshrl.u32 %v115, 3
    %v117 = vand.u32 %v115, 7
    %v118 = vsub.s32 0, %v117
    %v119 = vsel %vm113, %v118, %v117
    %vm120 = vcmp.ne.s32.totalorder %v112, 0
    %vm121 = vcmp.ne.s32.totalorder %v119, 0
    %vm122 = vcmp.lt.s32.totalorder %v112, 0
    %vm123 = vcmp.lt.s32.totalorder %v119, 0
    %vm124 = vmand %vm122, %vm120
    %vm125 = vmand %vm123, %vm121
    %v126 = vadd.s32 %v112, 8
    %v127 = vadd.s32 %v119, 8
    %v128 = vsel %vm124, %v126, %v112
    %v129 = vsel %vm125, %v127, %v119
    %vm130 = vcmp.ge.s32.totalorder %v128, 1
    %vm131 = vcmp.ge.s32.totalorder %v129, 1
    %v132 = vrot.slane %v101, 7
    %v133 = vrot.slane %v102, 7
    %vm134 = vcmp.lt.s32.totalorder %v104, 1
    %v135 = vsel %vm134, %v132, %v133
    %v136 = vsel %vm134, %v133, %v132
    %v137 = vsel %vm130, 1, 0
    %v138 = vsel %vm131, 1, 0
    %vm139 = vcmp.eq.s32.totalorder %v137, 1
    %vm140 = vcmp.eq.s32.totalorder %v138, 1
    %v141 = vsel %vm139, %v136, 0.0
    %v142 = vsel %vm140, %v135, 0.0
    %v143 = vpack.c.bf16 %v142, %v141
    %v146 = vunpack.c.l.b16 %v99
    %v147 = vunpack.c.l.b16 %v100
    %v148 = vpack.c.b16 %v147, %v146
    %v150 = vld [vmem:[#allocation7] sm:$0xf]
    %v151 = vld [vmem:[#allocation7 + $0x4] sm:$0xf]
    %v152 = vld [vmem:[#allocation7 + $0x8] sm:$0xf]
    %v153 = vld [vmem:[#allocation7 + $0xc] sm:$0xf]
    %v154 = vld [vmem:[#allocation7 + $0x10] sm:$0xf]
    %v155 = vld [vmem:[#allocation7 + $0x14] sm:$0xf]
    %v156 = vld [vmem:[#allocation7 + $0x18] sm:$0xf]
    %v157 = vld [vmem:[#allocation7 + $0x1c] sm:$0xf]
    %v158 = vld [vmem:[#allocation7 + $0x20] sm:$0xf]
    %v159 = vld [vmem:[#allocation7 + $0x24] sm:$0xf]
    %v160 = vld [vmem:[#allocation7 + $0x28] sm:$0xf]
    %v161 = vld [vmem:[#allocation7 + $0x2c] sm:$0xf]
    %v162 = vld [vmem:[#allocation7 + $0x30] sm:$0xf]
    %v163 = vld [vmem:[#allocation7 + $0x34] sm:$0xf]
    %v164 = vld [vmem:[#allocation7 + $0x38] sm:$0xf]
    %v165 = vld [vmem:[#allocation7 + $0x3c] sm:$0xf]
    %v166 = vld [vmem:[#allocation7 + $0x40] sm:$0xf]
    %v167 = vld [vmem:[#allocation7 + $0x44] sm:$0xf]
    %v168 = vld [vmem:[#allocation7 + $0x48] sm:$0xf]
    %v169 = vld [vmem:[#allocation7 + $0x4c] sm:$0xf]
    %v170 = vld [vmem:[#allocation7 + $0x50] sm:$0xf]
    %v171 = vld [vmem:[#allocation7 + $0x54] sm:$0xf]
    %v172 = vld [vmem:[#allocation7 + $0x58] sm:$0xf]
    %v173 = vld [vmem:[#allocation7 + $0x5c] sm:$0xf]
    %v174 = vld [vmem:[#allocation7 + $0x60] sm:$0xf]
    %v175 = vld [vmem:[#allocation7 + $0x64] sm:$0xf]
    %v176 = vld [vmem:[#allocation7 + $0x68] sm:$0xf]
    %v177 = vld [vmem:[#allocation7 + $0x6c] sm:$0xf]
    %v178 = vld [vmem:[#allocation7 + $0x70] sm:$0xf]
    %v179 = vld [vmem:[#allocation7 + $0x74] sm:$0xf]
    %v180 = vld [vmem:[#allocation7 + $0x78] sm:$0xf]
    %v181 = vld [vmem:[#allocation7 + $0x7c] sm:$0xf]
    %v182 = vld [vmem:[%s3] sm:$0x1]
    %v184 = vlaneseq
    %v185 = vshrl.u32 %v184, 7
    %v186 = vsub.s32 0, %v185
    %v187 = vrot.slane %v182, %v186
    %v221 = vunpack.c.l.b16 %v150
    %v222 = vunpack.c.l.b16 %v151
    %v223 = vunpack.c.l.b16 %v152
    %v224 = vunpack.c.l.b16 %v153
    %v225 = vunpack.c.l.b16 %v154
    %v226 = vunpack.c.l.b16 %v155
    %v227 = vunpack.c.l.b16 %v156
    %v228 = vunpack.c.l.b16 %v157
    %v229 = vunpack.c.l.b16 %v158
    %v230 = vunpack.c.l.b16 %v159
    %v231 = vunpack.c.l.b16 %v160
    %v232 = vunpack.c.l.b16 %v161
    %v233 = vunpack.c.l.b16 %v162
    %v234 = vunpack.c.l.b16 %v163
    %v235 = vunpack.c.l.b16 %v164
    %v236 = vunpack.c.l.b16 %v165
    %v237 = vunpack.c.l.b16 %v166
    %v238 = vunpack.c.l.b16 %v167
    %v239 = vunpack.c.l.b16 %v168
    %v240 = vunpack.c.l.b16 %v169
    %v241 = vunpack.c.l.b16 %v170
    %v242 = vunpack.c.l.b16 %v171
    %v243 = vunpack.c.l.b16 %v172
    %v244 = vunpack.c.l.b16 %v173
    %v245 = vunpack.c.l.b16 %v174
    %v246 = vunpack.c.l.b16 %v175
    %v247 = vunpack.c.l.b16 %v176
    %v248 = vunpack.c.l.b16 %v177
    %v249 = vunpack.c.l.b16 %v178
    %v250 = vunpack.c.l.b16 %v179
    %v251 = vunpack.c.l.b16 %v180
    %v252 = vunpack.c.l.b16 %v181
    %v253 = vpack.c.b16 %v222, %v221
    %v254 = vpack.c.b16 %v224, %v223
    %v255 = vpack.c.b16 %v226, %v225
    %v256 = vpack.c.b16 %v228, %v227
    %v257 = vpack.c.b16 %v230, %v229
    %v258 = vpack.c.b16 %v232, %v231
    %v259 = vpack.c.b16 %v234, %v233
    %v260 = vpack.c.b16 %v236, %v235
    %v261 = vpack.c.b16 %v238, %v237
    %v262 = vpack.c.b16 %v240, %v239
    %v263 = vpack.c.b16 %v242, %v241
    %v264 = vpack.c.b16 %v244, %v243
    %v265 = vpack.c.b16 %v246, %v245
    %v266 = vpack.c.b16 %v248, %v247
    %v267 = vpack.c.b16 %v250, %v249
    %v268 = vpack.c.b16 %v252, %v251
    %285 = vmatprep.subr.bf16.mxu0 0
    %286 = vmatpush1.bf16.msra.mxu0 %v253
    %287 = vmatprep.subr.bf16.mxu0 0
    %288 = vmatpush1.bf16.msra.mxu0 %v254
    %289 = vmatprep.subr.bf16.mxu0 0
    %290 = vmatpush1.bf16.msra.mxu0 %v255
    %291 = vmatprep.subr.bf16.mxu0 0
    %292 = vmatpush1.bf16.msra.mxu0 %v256
    %293 = vmatprep.subr.bf16.mxu0 0
    %294 = vmatpush1.bf16.msra.mxu0 %v257
    %295 = vmatprep.subr.bf16.mxu0 0
    %296 = vmatpush1.bf16.msra.mxu0 %v258
    %297 = vmatprep.subr.bf16.mxu0 0
    %298 = vmatpush1.bf16.msra.mxu0 %v259
    %299 = vmatprep.subr.bf16.mxu0 0
    %300 = vmatpush1.bf16.msra.mxu0 %v260
    %301 = vmatprep.subr.bf16.mxu0 0
    %302 = vmatpush1.bf16.msra.mxu0 %v261
    %303 = vmatprep.subr.bf16.mxu0 0
    %304 = vmatpush1.bf16.msra.mxu0 %v262
    %305 = vmatprep.subr.bf16.mxu0 0
    %306 = vmatpush1.bf16.msra.mxu0 %v263
    %307 = vmatprep.subr.bf16.mxu0 0
    %308 = vmatpush1.bf16.msra.mxu0 %v264
    %309 = vmatprep.subr.bf16.mxu0 0
    %310 = vmatpush1.bf16.msra.mxu0 %v265
    %311 = vmatprep.subr.bf16.mxu0 0
    %312 = vmatpush1.bf16.msra.mxu0 %v266
    %313 = vmatprep.subr.bf16.mxu0 0
    %314 = vmatpush1.bf16.msra.mxu0 %v267
    %315 = vmatprep.subr.bf16.mxu0 0
    %316 = vmatpush1.bf16.msra.mxu0 %v268
    %317 = vmatprep.mubr.bf16.mxu0 %v148
    %318 = vmatmul.mubr.bf16.gmra.mrb[0].mxu0 %v143
    %v319 = vpop.f32.mrb[0].mxu0
    %v320 = vadd.f32 %v187, %v319
    %v321 = vpop.f32.mrb[0].mxu0
    %v322 = vpop.f32.mrb[0].mxu0
    %v323 = vadd.f32 %v187, %v322
    %v324 = vpop.f32.mrb[0].mxu0
    %325 = vdwg.mxu0
    %v326 = vmax.f32 %v320, 0.0
    %v327 = vmax.f32 %v323, 0.0
    %v328 = vpack.c.bf16 %v327, %v326
    %v329 = vrot.slane %v326, 7
    %v330 = vrot.slane %v327, 7
    %v331 = vsel %vm134, %v329, %v330
    %v332 = vsel %vm134, %v330, %v329
    %v333 = vsel %vm139, %v332, 0.0
    %v334 = vsel %vm140, %v331, 0.0
    %v335 = vpack.c.bf16 %v334, %v333
    %v336 = vld [vmem:[#allocation8] sm:$0xf]
    %v337 = vld [vmem:[#allocation8 + $0x4] sm:$0xf]
    %v338 = vld [vmem:[#allocation8 + $0x8] sm:$0xf]
    %v339 = vld [vmem:[#allocation8 + $0xc] sm:$0xf]
    %v340 = vld [vmem:[#allocation8 + $0x10] sm:$0xf]
    %v341 = vld [vmem:[#allocation8 + $0x14] sm:$0xf]
    %v342 = vld [vmem:[#allocation8 + $0x18] sm:$0xf]
    %v343 = vld [vmem:[#allocation8 + $0x1c] sm:$0xf]
    %v344 = vld [vmem:[#allocation8 + $0x20] sm:$0xf]
    %v345 = vld [vmem:[#allocation8 + $0x24] sm:$0xf]
    %v346 = vld [vmem:[#allocation8 + $0x28] sm:$0xf]
    %v347 = vld [vmem:[#allocation8 + $0x2c] sm:$0xf]
    %v348 = vld [vmem:[#allocation8 + $0x30] sm:$0xf]
    %v349 = vld [vmem:[#allocation8 + $0x34] sm:$0xf]
    %v350 = vld [vmem:[#allocation8 + $0x38] sm:$0xf]
    %v351 = vld [vmem:[#allocation8 + $0x3c] sm:$0xf]
    %v352 = vld [vmem:[#allocation8 + $0x40] sm:$0xf]
    %v353 = vld [vmem:[#allocation8 + $0x44] sm:$0xf]
    %v354 = vld [vmem:[#allocation8 + $0x48] sm:$0xf]
    %v355 = vld [vmem:[#allocation8 + $0x4c] sm:$0xf]
    %v356 = vld [vmem:[#allocation8 + $0x50] sm:$0xf]
    %v357 = vld [vmem:[#allocation8 + $0x54] sm:$0xf]
    %v358 = vld [vmem:[#allocation8 + $0x58] sm:$0xf]
    %v359 = vld [vmem:[#allocation8 + $0x5c] sm:$0xf]
    %v360 = vld [vmem:[#allocation8 + $0x60] sm:$0xf]
    %v361 = vld [vmem:[#allocation8 + $0x64] sm:$0xf]
    %v362 = vld [vmem:[#allocation8 + $0x68] sm:$0xf]
    %v363 = vld [vmem:[#allocation8 + $0x6c] sm:$0xf]
    %v364 = vld [vmem:[#allocation8 + $0x70] sm:$0xf]
    %v365 = vld [vmem:[#allocation8 + $0x74] sm:$0xf]
    %v366 = vld [vmem:[#allocation8 + $0x78] sm:$0xf]
    %v367 = vld [vmem:[#allocation8 + $0x7c] sm:$0xf]
    %v368 = vld [vmem:[%s5] sm:$0x1]
    %v370 = vlaneseq
    %v371 = vshrl.u32 %v370, 7
    %v372 = vsub.s32 0, %v371
    %v373 = vrot.slane %v368, %v372
    %v407 = vunpack.c.l.b16 %v336
    %v408 = vunpack.c.l.b16 %v337
    %v409 = vunpack.c.l.b16 %v338
    %v410 = vunpack.c.l.b16 %v339
    %v411 = vunpack.c.l.b16 %v340
    %v412 = vunpack.c.l.b16 %v341
    %v413 = vunpack.c.l.b16 %v342
    %v414 = vunpack.c.l.b16 %v343
    %v415 = vunpack.c.l.b16 %v344
    %v416 = vunpack.c.l.b16 %v345
    %v417 = vunpack.c.l.b16 %v346
    %v418 = vunpack.c.l.b16 %v347
    %v419 = vunpack.c.l.b16 %v348
    %v420 = vunpack.c.l.b16 %v349
    %v421 = vunpack.c.l.b16 %v350
    %v422 = vunpack.c.l.b16 %v351
    %v423 = vunpack.c.l.b16 %v352
    %v424 = vunpack.c.l.b16 %v353
    %v425 = vunpack.c.l.b16 %v354
    %v426 = vunpack.c.l.b16 %v355
    %v427 = vunpack.c.l.b16 %v356
    %v428 = vunpack.c.l.b16 %v357
    %v429 = vunpack.c.l.b16 %v358
    %v430 = vunpack.c.l.b16 %v359
    %v431 = vunpack.c.l.b16 %v360
    %v432 = vunpack.c.l.b16 %v361
    %v433 = vunpack.c.l.b16 %v362
    %v434 = vunpack.c.l.b16 %v363
    %v435 = vunpack.c.l.b16 %v364
    %v436 = vunpack.c.l.b16 %v365
    %v437 = vunpack.c.l.b16 %v366
    %v438 = vunpack.c.l.b16 %v367
    %v439 = vpack.c.b16 %v408, %v407
    %v440 = vpack.c.b16 %v410, %v409
    %v441 = vpack.c.b16 %v412, %v411
    %v442 = vpack.c.b16 %v414, %v413
    %v443 = vpack.c.b16 %v416, %v415
    %v444 = vpack.c.b16 %v418, %v417
    %v445 = vpack.c.b16 %v420, %v419
    %v446 = vpack.c.b16 %v422, %v421
    %v447 = vpack.c.b16 %v424, %v423
    %v448 = vpack.c.b16 %v426, %v425
    %v449 = vpack.c.b16 %v428, %v427
    %v450 = vpack.c.b16 %v430, %v429
    %v451 = vpack.c.b16 %v432, %v431
    %v452 = vpack.c.b16 %v434, %v433
    %v453 = vpack.c.b16 %v436, %v435
    %v454 = vpack.c.b16 %v438, %v437
    %471 = vmatprep.subr.bf16.mxu0 0
    %472 = vmatpush1.bf16.msra.mxu0 %v439
    %473 = vmatprep.subr.bf16.mxu0 0
    %474 = vmatpush1.bf16.msra.mxu0 %v440
    %475 = vmatprep.subr.bf16.mxu0 0
    %476 = vmatpush1.bf16.msra.mxu0 %v441
    %477 = vmatprep.subr.bf16.mxu0 0
    %478 = vmatpush1.bf16.msra.mxu0 %v442
    %479 = vmatprep.subr.bf16.mxu0 0
    %480 = vmatpush1.bf16.msra.mxu0 %v443
    %481 = vmatprep.subr.bf16.mxu0 0
    %482 = vmatpush1.bf16.msra.mxu0 %v444
    %483 = vmatprep.subr.bf16.mxu0 0
    %484 = vmatpush1.bf16.msra.mxu0 %v445
    %485 = vmatprep.subr.bf16.mxu0 0
    %486 = vmatpush1.bf16.msra.mxu0 %v446
    %487 = vmatprep.subr.bf16.mxu0 0
    %488 = vmatpush1.bf16.msra.mxu0 %v447
    %489 = vmatprep.subr.bf16.mxu0 0
    %490 = vmatpush1.bf16.msra.mxu0 %v448
    %491 = vmatprep.subr.bf16.mxu0 0
    %492 = vmatpush1.bf16.msra.mxu0 %v449
    %493 = vmatprep.subr.bf16.mxu0 0
    %494 = vmatpush1.bf16.msra.mxu0 %v450
    %495 = vmatprep.subr.bf16.mxu0 0
    %496 = vmatpush1.bf16.msra.mxu0 %v451
    %497 = vmatprep.subr.bf16.mxu0 0
    %498 = vmatpush1.bf16.msra.mxu0 %v452
    %499 = vmatprep.subr.bf16.mxu0 0
    %500 = vmatpush1.bf16.msra.mxu0 %v453
    %501 = vmatprep.subr.bf16.mxu0 0
    %502 = vmatpush1.bf16.msra.mxu0 %v454
    %503 = vmatprep.mubr.bf16.mxu0 %v328
    %504 = vmatmul.mubr.bf16.gmra.mrb[0].mxu0 %v335
    %v505 = vpop.f32.mrb[0].mxu0
    %v506 = vadd.f32 %v373, %v505
    %v507 = vpop.f32.mrb[0].mxu0
    %v508 = vpop.f32.mrb[0].mxu0
    %v509 = vadd.f32 %v373, %v508
    %v510 = vpop.f32.mrb[0].mxu0
    %511 = vdwg.mxu0
    %v512 = vmax.f32 %v506, 0.0
    %v513 = vmax.f32 %v509, 0.0
    %v514 = vld [vmem:[#allocation10] sm:$0xf]
    %v515 = vld [vmem:[#allocation10 + $0x4] sm:$0xf]
    %v516 = vld [vmem:[#allocation10 + $0x8] sm:$0xf]
    %v517 = vld [vmem:[#allocation10 + $0xc] sm:$0xf]
    %v518 = vld [vmem:[#allocation10 + $0x10] sm:$0xf]
    %v519 = vld [vmem:[#allocation10 + $0x14] sm:$0xf]
    %v520 = vld [vmem:[#allocation10 + $0x18] sm:$0xf]
    %v521 = vld [vmem:[#allocation10 + $0x1c] sm:$0xf]
    %v522 = vld [vmem:[#allocation10 + $0x20] sm:$0xf]
    %v523 = vld [vmem:[#allocation10 + $0x24] sm:$0xf]
    %v524 = vld [vmem:[#allocation10 + $0x28] sm:$0xf]
    %v525 = vld [vmem:[#allocation10 + $0x2c] sm:$0xf]
    %v526 = vld [vmem:[#allocation10 + $0x30] sm:$0xf]
    %v527 = vld [vmem:[#allocation10 + $0x34] sm:$0xf]
    %v528 = vld [vmem:[#allocation10 + $0x38] sm:$0xf]
    %v529 = vld [vmem:[#allocation10 + $0x3c] sm:$0xf]
    %v530 = vld [vmem:[%s7] sm:$0x1]
    %v532 = vlaneseq
    %v533 = vshrl.u32 %v532, 7
    %v534 = vsub.s32 0, %v533
    %v535 = vrot.slane %v530, %v534
    %v553 = vunpack.c.l.b16 %v514
    %v554 = vunpack.c.l.b16 %v515
    %v555 = vunpack.c.l.b16 %v516
    %v556 = vunpack.c.l.b16 %v517
    %v557 = vunpack.c.l.b16 %v518
    %v558 = vunpack.c.l.b16 %v519
    %v559 = vunpack.c.l.b16 %v520
    %v560 = vunpack.c.l.b16 %v521
    %v561 = vunpack.c.l.b16 %v522
    %v562 = vunpack.c.l.b16 %v523
    %v563 = vunpack.c.l.b16 %v524
    %v564 = vunpack.c.l.b16 %v525
    %v565 = vunpack.c.l.b16 %v526
    %v566 = vunpack.c.l.b16 %v527
    %v567 = vunpack.c.l.b16 %v528
    %v568 = vunpack.c.l.b16 %v529
    %v569 = vpack.c.b16 %v554, %v553
    %v570 = vpack.c.b16 %v556, %v555
    %v571 = vpack.c.b16 %v558, %v557
    %v572 = vpack.c.b16 %v560, %v559
    %v573 = vpack.c.b16 %v562, %v561
    %v574 = vpack.c.b16 %v564, %v563
    %v575 = vpack.c.b16 %v566, %v565
    %v576 = vpack.c.b16 %v568, %v567
    %585 = vmatprep.subr.bf16.mxu0 0
    %586 = vmatpush1.bf16.msra.mxu0 %v569
    %587 = vmatprep.subr.bf16.mxu0 0
    %588 = vmatpush1.bf16.msra.mxu0 %v570
    %589 = vmatprep.subr.bf16.mxu0 0
    %590 = vmatpush1.bf16.msra.mxu0 %v571
    %591 = vmatprep.subr.bf16.mxu0 0
    %592 = vmatpush1.bf16.msra.mxu0 %v572
    %593 = vmatprep.subr.bf16.mxu0 0
    %594 = vmatpush1.bf16.msra.mxu0 %v573
    %595 = vmatprep.subr.bf16.mxu0 0
    %596 = vmatpush1.bf16.msra.mxu0 %v574
    %597 = vmatprep.subr.bf16.mxu0 0
    %598 = vmatpush1.bf16.msra.mxu0 %v575
    %599 = vmatprep.subr.bf16.mxu0 0
    %600 = vmatpush1.bf16.msra.mxu0 %v576
    %601 = vmatprep.subr.bf16.mxu0 0
    %602 = vmatpush1.bf16.msra.mxu0 0
    %603 = vmatprep.subr.bf16.mxu0 0
    %604 = vmatpush1.bf16.msra.mxu0 0
    %605 = vmatprep.subr.bf16.mxu0 0
    %606 = vmatpush1.bf16.msra.mxu0 0
    %607 = vmatprep.subr.bf16.mxu0 0
    %608 = vmatpush1.bf16.msra.mxu0 0
    %609 = vmatprep.subr.bf16.mxu0 0
    %610 = vmatpush1.bf16.msra.mxu0 0
    %611 = vmatprep.subr.bf16.mxu0 0
    %612 = vmatpush1.bf16.msra.mxu0 0
    %613 = vmatprep.subr.bf16.mxu0 0
    %614 = vmatpush1.bf16.msra.mxu0 0
    %615 = vmatprep.subr.bf16.mxu0 0
    %616 = vmatpush1.bf16.msra.mxu0 0
    %617 = vmatprep.mubr.bf16.mxu0 0
    %618 = vmatmul.mubr.bf16.gmra.mrb[0].mxu0 %v148
    %v619 = vpop.f32.mrb[0].mxu0
    %v620 = vadd.f32 %v535, %v619
    %v621 = vpop.f32.mrb[0].mxu0
    %v622 = vpop.f32.mrb[0].mxu0
    %v623 = vadd.f32 %v535, %v622
    %v624 = vpop.f32.mrb[0].mxu0
    %625 = vdwg.mxu0
    %v626 = vadd.f32 %v512, %v620
    %v627 = vadd.f32 %v513, %v623
    %v628 = vmax.f32 %v626, 0.0
    %v629 = vmax.f32 %v627, 0.0
    %vm630 = vcmp.ge.s32.totalorder %v128, 2
    %vm631 = vcmp.ge.s32.totalorder %v129, 2
    %v632 = vpack.c.bf16 %v629, %v628
    %v633 = vrot.slane %v628, 6
    %v634 = vrot.slane %v629, 6
    %vm635 = vcmp.lt.s32.totalorder %v104, 2
    %v636 = vsel %vm635, %v633, %v634
    %v637 = vsel %vm635, %v634, %v633
    %v638 = vsel %vm630, 1, 0
    %v639 = vsel %vm631, 1, 0
    %vm640 = vcmp.eq.s32.totalorder %v638, 1
    %vm641 = vcmp.eq.s32.totalorder %v639, 1
    %v642 = vsel %vm640, %v637, 0.0
    %v643 = vsel %vm641, %v636, 0.0
    %v644 = vpack.c.bf16 %v643, %v642
    %s645 = scalar_lea.vmem [#allocation7], 128
    %v646 = vld [vmem:[%s645] sm:$0xf]
    %v647 = vld [vmem:[%s645 + $0x4] sm:$0xf]
    %v648 = vld [vmem:[%s645 + $0x8] sm:$0xf]
    %v649 = vld [vmem:[%s645 + $0xc] sm:$0xf]
    %v650 = vld [vmem:[%s645 + $0x10] sm:$0xf]
    %v651 = vld [vmem:[%s645 + $0x14] sm:$0xf]
    %v652 = vld [vmem:[%s645 + $0x18] sm:$0xf]
    %v653 = vld [vmem:[%s645 + $0x1c] sm:$0xf]
    %v654 = vld [vmem:[%s645 + $0x20] sm:$0xf]
    %v655 = vld [vmem:[%s645 + $0x24] sm:$0xf]
    %v656 = vld [vmem:[%s645 + $0x28] sm:$0xf]
    %v657 = vld [vmem:[%s645 + $0x2c] sm:$0xf]
    %v658 = vld [vmem:[%s645 + $0x30] sm:$0xf]
    %v659 = vld [vmem:[%s645 + $0x34] sm:$0xf]
    %v660 = vld [vmem:[%s645 + $0x38] sm:$0xf]
    %v661 = vld [vmem:[%s645 + $0x3c] sm:$0xf]
    %v662 = vld [vmem:[%s645 + $0x40] sm:$0xf]
    %v663 = vld [vmem:[%s645 + $0x44] sm:$0xf]
    %v664 = vld [vmem:[%s645 + $0x48] sm:$0xf]
    %v665 = vld [vmem:[%s645 + $0x4c] sm:$0xf]
    %v666 = vld [vmem:[%s645 + $0x50] sm:$0xf]
    %v667 = vld [vmem:[%s645 + $0x54] sm:$0xf]
    %v668 = vld [vmem:[%s645 + $0x58] sm:$0xf]
    %v669 = vld [vmem:[%s645 + $0x5c] sm:$0xf]
    %v670 = vld [vmem:[%s645 + $0x60] sm:$0xf]
    %v671 = vld [vmem:[%s645 + $0x64] sm:$0xf]
    %v672 = vld [vmem:[%s645 + $0x68] sm:$0xf]
    %v673 = vld [vmem:[%s645 + $0x6c] sm:$0xf]
    %v674 = vld [vmem:[%s645 + $0x70] sm:$0xf]
    %v675 = vld [vmem:[%s645 + $0x74] sm:$0xf]
    %v676 = vld [vmem:[%s645 + $0x78] sm:$0xf]
    %v677 = vld [vmem:[%s645 + $0x7c] sm:$0xf]
    %s678 = scalar_lea.vmem %s3, 1
    %v679 = vld [vmem:[%s678] sm:$0x1]
    %v681 = vlaneseq
    %v682 = vshrl.u32 %v681, 7
    %v683 = vsub.s32 0, %v682
    %v684 = vrot.slane %v679, %v683
    %v718 = vunpack.c.l.b16 %v646
    %v719 = vunpack.c.l.b16 %v647
    %v720 = vunpack.c.l.b16 %v648
    %v721 = vunpack.c.l.b16 %v649
    %v722 = vunpack.c.l.b16 %v650
    %v723 = vunpack.c.l.b16 %v651
    %v724 = vunpack.c.l.b16 %v652
    %v725 = vunpack.c.l.b16 %v653
    %v726 = vunpack.c.l.b16 %v654
    %v727 = vunpack.c.l.b16 %v655
    %v728 = vunpack.c.l.b16 %v656
    %v729 = vunpack.c.l.b16 %v657
    %v730 = vunpack.c.l.b16 %v658
    %v731 = vunpack.c.l.b16 %v659
    %v732 = vunpack.c.l.b16 %v660
    %v733 = vunpack.c.l.b16 %v661
    %v734 = vunpack.c.l.b16 %v662
    %v735 = vunpack.c.l.b16 %v663
    %v736 = vunpack.c.l.b16 %v664
    %v737 = vunpack.c.l.b16 %v665
    %v738 = vunpack.c.l.b16 %v666
    %v739 = vunpack.c.l.b16 %v667
    %v740 = vunpack.c.l.b16 %v668
    %v741 = vunpack.c.l.b16 %v669
    %v742 = vunpack.c.l.b16 %v670
    %v743 = vunpack.c.l.b16 %v671
    %v744 = vunpack.c.l.b16 %v672
    %v745 = vunpack.c.l.b16 %v673
    %v746 = vunpack.c.l.b16 %v674
    %v747 = vunpack.c.l.b16 %v675
    %v748 = vunpack.c.l.b16 %v676
    %v749 = vunpack.c.l.b16 %v677
    %v750 = vpack.c.b16 %v719, %v718
    %v751 = vpack.c.b16 %v721, %v720
    %v752 = vpack.c.b16 %v723, %v722
    %v753 = vpack.c.b16 %v725, %v724
    %v754 = vpack.c.b16 %v727, %v726
    %v755 = vpack.c.b16 %v729, %v728
    %v756 = vpack.c.b16 %v731, %v730
    %v757 = vpack.c.b16 %v733, %v732
    %v758 = vpack.c.b16 %v735, %v734
    %v759 = vpack.c.b16 %v737, %v736
    %v760 = vpack.c.b16 %v739, %v738
    %v761 = vpack.c.b16 %v741, %v740
    %v762 = vpack.c.b16 %v743, %v742
    %v763 = vpack.c.b16 %v745, %v744
    %v764 = vpack.c.b16 %v747, %v746
    %v765 = vpack.c.b16 %v749, %v748
    %782 = vmatprep.subr.bf16.mxu0 0
    %783 = vmatpush1.bf16.msra.mxu0 %v750
    %784 = vmatprep.subr.bf16.mxu0 0
    %785 = vmatpush1.bf16.msra.mxu0 %v751
    %786 = vmatprep.subr.bf16.mxu0 0
    %787 = vmatpush1.bf16.msra.mxu0 %v752
    %788 = vmatprep.subr.bf16.mxu0 0
    %789 = vmatpush1.bf16.msra.mxu0 %v753
    %790 = vmatprep.subr.bf16.mxu0 0
    %791 = vmatpush1.bf16.msra.mxu0 %v754
    %792 = vmatprep.subr.bf16.mxu0 0
    %793 = vmatpush1.bf16.msra.mxu0 %v755
    %794 = vmatprep.subr.bf16.mxu0 0
    %795 = vmatpush1.bf16.msra.mxu0 %v756
    %796 = vmatprep.subr.bf16.mxu0 0
    %797 = vmatpush1.bf16.msra.mxu0 %v757
    %798 = vmatprep.subr.bf16.mxu0 0
    %799 = vmatpush1.bf16.msra.mxu0 %v758
    %800 = vmatprep.subr.bf16.mxu0 0
    %801 = vmatpush1.bf16.msra.mxu0 %v759
    %802 = vmatprep.subr.bf16.mxu0 0
    %803 = vmatpush1.bf16.msra.mxu0 %v760
    %804 = vmatprep.subr.bf16.mxu0 0
    %805 = vmatpush1.bf16.msra.mxu0 %v761
    %806 = vmatprep.subr.bf16.mxu0 0
    %807 = vmatpush1.bf16.msra.mxu0 %v762
    %808 = vmatprep.subr.bf16.mxu0 0
    %809 = vmatpush1.bf16.msra.mxu0 %v763
    %810 = vmatprep.subr.bf16.mxu0 0
    %811 = vmatpush1.bf16.msra.mxu0 %v764
    %812 = vmatprep.subr.bf16.mxu0 0
    %813 = vmatpush1.bf16.msra.mxu0 %v765
    %814 = vmatprep.mubr.bf16.mxu0 %v632
    %815 = vmatmul.mubr.bf16.gmra.mrb[0].mxu0 %v644
    %v816 = vpop.f32.mrb[0].mxu0
    %v817 = vadd.f32 %v684, %v816
    %v818 = vpop.f32.mrb[0].mxu0
    %v819 = vpop.f32.mrb[0].mxu0
    %v820 = vadd.f32 %v684, %v819
    %v821 = vpop.f32.mrb[0].mxu0
    %822 = vdwg.mxu0
    %v823 = vmax.f32 %v817, 0.0
    %v824 = vmax.f32 %v820, 0.0
    %v825 = vpack.c.bf16 %v824, %v823
    %v826 = vrot.slane %v823, 6
    %v827 = vrot.slane %v824, 6
    %v828 = vsel %vm635, %v826, %v827
    %v829 = vsel %vm635, %v827, %v826
    %v830 = vsel %vm640, %v829, 0.0
    %v831 = vsel %vm641, %v828, 0.0
    %v832 = vpack.c.bf16 %v831, %v830
    %s833 = scalar_lea.vmem [#allocation8], 128
    %v834 = vld [vmem:[%s833] sm:$0xf]
    %v835 = vld [vmem:[%s833 + $0x4] sm:$0xf]
    %v836 = vld [vmem:[%s833 + $0x8] sm:$0xf]
    %v837 = vld [vmem:[%s833 + $0xc] sm:$0xf]
    %v838 = vld [vmem:[%s833 + $0x10] sm:$0xf]
    %v839 = vld [vmem:[%s833 + $0x14] sm:$0xf]
    %v840 = vld [vmem:[%s833 + $0x18] sm:$0xf]
    %v841 = vld [vmem:[%s833 + $0x1c] sm:$0xf]
    %v842 = vld [vmem:[%s833 + $0x20] sm:$0xf]
    %v843 = vld [vmem:[%s833 + $0x24] sm:$0xf]
    %v844 = vld [vmem:[%s833 + $0x28] sm:$0xf]
    %v845 = vld [vmem:[%s833 + $0x2c] sm:$0xf]
    %v846 = vld [vmem:[%s833 + $0x30] sm:$0xf]
    %v847 = vld [vmem:[%s833 + $0x34] sm:$0xf]
    %v848 = vld [vmem:[%s833 + $0x38] sm:$0xf]
    %v849 = vld [vmem:[%s833 + $0x3c] sm:$0xf]
    %v850 = vld [vmem:[%s833 + $0x40] sm:$0xf]
    %v851 = vld [vmem:[%s833 + $0x44] sm:$0xf]
    %v852 = vld [vmem:[%s833 + $0x48] sm:$0xf]
    %v853 = vld [vmem:[%s833 + $0x4c] sm:$0xf]
    %v854 = vld [vmem:[%s833 + $0x50] sm:$0xf]
    %v855 = vld [vmem:[%s833 + $0x54] sm:$0xf]
    %v856 = vld [vmem:[%s833 + $0x58] sm:$0xf]
    %v857 = vld [vmem:[%s833 + $0x5c] sm:$0xf]
    %v858 = vld [vmem:[%s833 + $0x60] sm:$0xf]
    %v859 = vld [vmem:[%s833 + $0x64] sm:$0xf]
    %v860 = vld [vmem:[%s833 + $0x68] sm:$0xf]
    %v861 = vld [vmem:[%s833 + $0x6c] sm:$0xf]
    %v862 = vld [vmem:[%s833 + $0x70] sm:$0xf]
    %v863 = vld [vmem:[%s833 + $0x74] sm:$0xf]
    %v864 = vld [vmem:[%s833 + $0x78] sm:$0xf]
    %v865 = vld [vmem:[%s833 + $0x7c] sm:$0xf]
    %s866 = scalar_lea.vmem %s5, 1
    %v867 = vld [vmem:[%s866] sm:$0x1]
    %v869 = vlaneseq
    %v870 = vshrl.u32 %v869, 7
    %v871 = vsub.s32 0, %v870
    %v872 = vrot.slane %v867, %v871
    %v906 = vunpack.c.l.b16 %v834
    %v907 = vunpack.c.l.b16 %v835
    %v908 = vunpack.c.l.b16 %v836
    %v909 = vunpack.c.l.b16 %v837
    %v910 = vunpack.c.l.b16 %v838
    %v911 = vunpack.c.l.b16 %v839
    %v912 = vunpack.c.l.b16 %v840
    %v913 = vunpack.c.l.b16 %v841
    %v914 = vunpack.c.l.b16 %v842
    %v915 = vunpack.c.l.b16 %v843
    %v916 = vunpack.c.l.b16 %v844
    %v917 = vunpack.c.l.b16 %v845
    %v918 = vunpack.c.l.b16 %v846
    %v919 = vunpack.c.l.b16 %v847
    %v920 = vunpack.c.l.b16 %v848
    %v921 = vunpack.c.l.b16 %v849
    %v922 = vunpack.c.l.b16 %v850
    %v923 = vunpack.c.l.b16 %v851
    %v924 = vunpack.c.l.b16 %v852
    %v925 = vunpack.c.l.b16 %v853
    %v926 = vunpack.c.l.b16 %v854
    %v927 = vunpack.c.l.b16 %v855
    %v928 = vunpack.c.l.b16 %v856
    %v929 = vunpack.c.l.b16 %v857
    %v930 = vunpack.c.l.b16 %v858
    %v931 = vunpack.c.l.b16 %v859
    %v932 = vunpack.c.l.b16 %v860
    %v933 = vunpack.c.l.b16 %v861
    %v934 = vunpack.c.l.b16 %v862
    %v935 = vunpack.c.l.b16 %v863
    %v936 = vunpack.c.l.b16 %v864
    %v937 = vunpack.c.l.b16 %v865
    %v938 = vpack.c.b16 %v907, %v906
    %v939 = vpack.c.b16 %v909, %v908
    %v940 = vpack.c.b16 %v911, %v910
    %v941 = vpack.c.b16 %v913, %v912
    %v942 = vpack.c.b16 %v915, %v914
    %v943 = vpack.c.b16 %v917, %v916
    %v944 = vpack.c.b16 %v919, %v918
    %v945 = vpack.c.b16 %v921, %v920
    %v946 = vpack.c.b16 %v923, %v922
    %v947 = vpack.c.b16 %v925, %v924
    %v948 = vpack.c.b16 %v927, %v926
    %v949 = vpack.c.b16 %v929, %v928
    %v950 = vpack.c.b16 %v931, %v930
    %v951 = vpack.c.b16 %v933, %v932
    %v952 = vpack.c.b16 %v935, %v934
    %v953 = vpack.c.b16 %v937, %v936
    %970 = vmatprep.subr.bf16.mxu0 0
    %971 = vmatpush1.bf16.msra.mxu0 %v938
    %972 = vmatprep.subr.bf16.mxu0 0
    %973 = vmatpush1.bf16.msra.mxu0 %v939
    %974 = vmatprep.subr.bf16.mxu0 0
    %975 = vmatpush1.bf16.msra.mxu0 %v940
    %976 = vmatprep.subr.bf16.mxu0 0
    %977 = vmatpush1.bf16.msra.mxu0 %v941
    %978 = vmatprep.subr.bf16.mxu0 0
    %979 = vmatpush1.bf16.msra.mxu0 %v942
    %980 = vmatprep.subr.bf16.mxu0 0
    %981 = vmatpush1.bf16.msra.mxu0 %v943
    %982 = vmatprep.subr.bf16.mxu0 0
    %983 = vmatpush1.bf16.msra.mxu0 %v944
    %984 = vmatprep.subr.bf16.mxu0 0
    %985 = vmatpush1.bf16.msra.mxu0 %v945
    %986 = vmatprep.subr.bf16.mxu0 0
    %987 = vmatpush1.bf16.msra.mxu0 %v946
    %988 = vmatprep.subr.bf16.mxu0 0
    %989 = vmatpush1.bf16.msra.mxu0 %v947
    %990 = vmatprep.subr.bf16.mxu0 0
    %991 = vmatpush1.bf16.msra.mxu0 %v948
    %992 = vmatprep.subr.bf16.mxu0 0
    %993 = vmatpush1.bf16.msra.mxu0 %v949
    %994 = vmatprep.subr.bf16.mxu0 0
    %995 = vmatpush1.bf16.msra.mxu0 %v950
    %996 = vmatprep.subr.bf16.mxu0 0
    %997 = vmatpush1.bf16.msra.mxu0 %v951
    %998 = vmatprep.subr.bf16.mxu0 0
    %999 = vmatpush1.bf16.msra.mxu0 %v952
    %1000 = vmatprep.subr.bf16.mxu0 0
    %1001 = vmatpush1.bf16.msra.mxu0 %v953
    %1002 = vmatprep.mubr.bf16.mxu0 %v825
    %1003 = vmatmul.mubr.bf16.gmra.mrb[0].mxu0 %v832
    %v1004 = vpop.f32.mrb[0].mxu0
    %v1005 = vadd.f32 %v872, %v1004
    %v1006 = vpop.f32.mrb[0].mxu0
    %v1007 = vpop.f32.mrb[0].mxu0
    %v1008 = vadd.f32 %v872, %v1007
    %v1009 = vpop.f32.mrb[0].mxu0
    %1010 = vdwg.mxu0
    %v1011 = vmax.f32 %v1005, 0.0
    %v1012 = vmax.f32 %v1008, 0.0
    %v1013 = vadd.f32 %v1011, %v628
    %v1014 = vadd.f32 %v1012, %v629
    %v1015 = vmax.f32 %v1013, 0.0
    %v1016 = vmax.f32 %v1014, 0.0
    %vm1017 = vcmp.ge.s32.totalorder %v128, 4
    %vm1018 = vcmp.ge.s32.totalorder %v129, 4
    %v1019 = vpack.c.bf16 %v1016, %v1015
    %v1020 = vrot.slane %v1015, 4
    %v1021 = vrot.slane %v1016, 4
    %vm1022 = vcmp.lt.s32.totalorder %v104, 4
    %v1023 = vsel %vm1022, %v1020, %v1021
    %v1024 = vsel %vm1022, %v1021, %v1020
    %v1025 = vsel %vm1017, 1, 0
    %v1026 = vsel %vm1018, 1, 0
    %vm1027 = vcmp.eq.s32.totalorder %v1025, 1
    %vm1028 = vcmp.eq.s32.totalorder %v1026, 1
    %v1029 = vsel %vm1027, %v1024, 0.0
    %v1030 = vsel %vm1028, %v1023, 0.0
    %v1031 = vpack.c.bf16 %v1030, %v1029
    %s1032 = scalar_lea.vmem [#allocation7], 256
    %v1033 = vld [vmem:[%s1032] sm:$0xf]
    %v1034 = vld [vmem:[%s1032 + $0x4] sm:$0xf]
    %v1035 = vld [vmem:[%s1032 + $0x8] sm:$0xf]
    %v1036 = vld [vmem:[%s1032 + $0xc] sm:$0xf]
    %v1037 = vld [vmem:[%s1032 + $0x10] sm:$0xf]
    %v1038 = vld [vmem:[%s1032 + $0x14] sm:$0xf]
    %v1039 = vld [vmem:[%s1032 + $0x18] sm:$0xf]
    %v1040 = vld [vmem:[%s1032 + $0x1c] sm:$0xf]
    %v1041 = vld [vmem:[%s1032 + $0x20] sm:$0xf]
    %v1042 = vld [vmem:[%s1032 + $0x24] sm:$0xf]
    %v1043 = vld [vmem:[%s1032 + $0x28] sm:$0xf]
    %v1044 = vld [vmem:[%s1032 + $0x2c] sm:$0xf]
    %v1045 = vld [vmem:[%s1032 + $0x30] sm:$0xf]
    %v1046 = vld [vmem:[%s1032 + $0x34] sm:$0xf]
    %v1047 = vld [vmem:[%s1032 + $0x38] sm:$0xf]
    %v1048 = vld [vmem:[%s1032 + $0x3c] sm:$0xf]
    %v1049 = vld [vmem:[%s1032 + $0x40] sm:$0xf]
    %v1050 = vld [vmem:[%s1032 + $0x44] sm:$0xf]
    %v1051 = vld [vmem:[%s1032 + $0x48] sm:$0xf]
    %v1052 = vld [vmem:[%s1032 + $0x4c] sm:$0xf]
    %v1053 = vld [vmem:[%s1032 + $0x50] sm:$0xf]
    %v1054 = vld [vmem:[%s1032 + $0x54] sm:$0xf]
    %v1055 = vld [vmem:[%s1032 + $0x58] sm:$0xf]
    %v1056 = vld [vmem:[%s1032 + $0x5c] sm:$0xf]
    %v1057 = vld [vmem:[%s1032 + $0x60] sm:$0xf]
    %v1058 = vld [vmem:[%s1032 + $0x64] sm:$0xf]
    %v1059 = vld [vmem:[%s1032 + $0x68] sm:$0xf]
    %v1060 = vld [vmem:[%s1032 + $0x6c] sm:$0xf]
    %v1061 = vld [vmem:[%s1032 + $0x70] sm:$0xf]
    %v1062 = vld [vmem:[%s1032 + $0x74] sm:$0xf]
    %v1063 = vld [vmem:[%s1032 + $0x78] sm:$0xf]
    %v1064 = vld [vmem:[%s1032 + $0x7c] sm:$0xf]
    %s1065 = scalar_lea.vmem %s3, 2
    %v1066 = vld [vmem:[%s1065] sm:$0x1]
    %v1068 = vlaneseq
    %v1069 = vshrl.u32 %v1068, 7
    %v1070 = vsub.s32 0, %v1069
    %v1071 = vrot.slane %v1066, %v1070
    %v1105 = vunpack.c.l.b16 %v1033
    %v1106 = vunpack.c.l.b16 %v1034
    %v1107 = vunpack.c.l.b16 %v1035
    %v1108 = vunpack.c.l.b16 %v1036
    %v1109 = vunpack.c.l.b16 %v1037
    %v1110 = vunpack.c.l.b16 %v1038
    %v1111 = vunpack.c.l.b16 %v1039
    %v1112 = vunpack.c.l.b16 %v1040
    %v1113 = vunpack.c.l.b16 %v1041
    %v1114 = vunpack.c.l.b16 %v1042
    %v1115 = vunpack.c.l.b16 %v1043
    %v1116 = vunpack.c.l.b16 %v1044
    %v1117 = vunpack.c.l.b16 %v1045
    %v1118 = vunpack.c.l.b16 %v1046
    %v1119 = vunpack.c.l.b16 %v1047
    %v1120 = vunpack.c.l.b16 %v1048
    %v1121 = vunpack.c.l.b16 %v1049
    %v1122 = vunpack.c.l.b16 %v1050
    %v1123 = vunpack.c.l.b16 %v1051
    %v1124 = vunpack.c.l.b16 %v1052
    %v1125 = vunpack.c.l.b16 %v1053
    %v1126 = vunpack.c.l.b16 %v1054
    %v1127 = vunpack.c.l.b16 %v1055
    %v1128 = vunpack.c.l.b16 %v1056
    %v1129 = vunpack.c.l.b16 %v1057
    %v1130 = vunpack.c.l.b16 %v1058
    %v1131 = vunpack.c.l.b16 %v1059
    %v1132 = vunpack.c.l.b16 %v1060
    %v1133 = vunpack.c.l.b16 %v1061
    %v1134 = vunpack.c.l.b16 %v1062
    %v1135 = vunpack.c.l.b16 %v1063
    %v1136 = vunpack.c.l.b16 %v1064
    %v1137 = vpack.c.b16 %v1106, %v1105
    %v1138 = vpack.c.b16 %v1108, %v1107
    %v1139 = vpack.c.b16 %v1110, %v1109
    %v1140 = vpack.c.b16 %v1112, %v1111
    %v1141 = vpack.c.b16 %v1114, %v1113
    %v1142 = vpack.c.b16 %v1116, %v1115
    %v1143 = vpack.c.b16 %v1118, %v1117
    %v1144 = vpack.c.b16 %v1120, %v1119
    %v1145 = vpack.c.b16 %v1122, %v1121
    %v1146 = vpack.c.b16 %v1124, %v1123
    %v1147 = vpack.c.b16 %v1126, %v1125
    %v1148 = vpack.c.b16 %v1128, %v1127
    %v1149 = vpack.c.b16 %v1130, %v1129
    %v1150 = vpack.c.b16 %v1132, %v1131
    %v1151 = vpack.c.b16 %v1134, %v1133
    %v1152 = vpack.c.b16 %v1136, %v1135
    %1169 = vmatprep.subr.bf16.mxu0 0
    %1170 = vmatpush1.bf16.msra.mxu0 %v1137
    %1171 = vmatprep.subr.bf16.mxu0 0
    %1172 = vmatpush1.bf16.msra.mxu0 %v1138
    %1173 = vmatprep.subr.bf16.mxu0 0
    %1174 = vmatpush1.bf16.msra.mxu0 %v1139
    %1175 = vmatprep.subr.bf16.mxu0 0
    %1176 = vmatpush1.bf16.msra.mxu0 %v1140
    %1177 = vmatprep.subr.bf16.mxu0 0
    %1178 = vmatpush1.bf16.msra.mxu0 %v1141
    %1179 = vmatprep.subr.bf16.mxu0 0
    %1180 = vmatpush1.bf16.msra.mxu0 %v1142
    %1181 = vmatprep.subr.bf16.mxu0 0
    %1182 = vmatpush1.bf16.msra.mxu0 %v1143
    %1183 = vmatprep.subr.bf16.mxu0 0
    %1184 = vmatpush1.bf16.msra.mxu0 %v1144
    %1185 = vmatprep.subr.bf16.mxu0 0
    %1186 = vmatpush1.bf16.msra.mxu0 %v1145
    %1187 = vmatprep.subr.bf16.mxu0 0
    %1188 = vmatpush1.bf16.msra.mxu0 %v1146
    %1189 = vmatprep.subr.bf16.mxu0 0
    %1190 = vmatpush1.bf16.msra.mxu0 %v1147
    %1191 = vmatprep.subr.bf16.mxu0 0
    %1192 = vmatpush1.bf16.msra.mxu0 %v1148
    %1193 = vmatprep.subr.bf16.mxu0 0
    %1194 = vmatpush1.bf16.msra.mxu0 %v1149
    %1195 = vmatprep.subr.bf16.mxu0 0
    %1196 = vmatpush1.bf16.msra.mxu0 %v1150
    %1197 = vmatprep.subr.bf16.mxu0 0
    %1198 = vmatpush1.bf16.msra.mxu0 %v1151
    %1199 = vmatprep.subr.bf16.mxu0 0
    %1200 = vmatpush1.bf16.msra.mxu0 %v1152
    %1201 = vmatprep.mubr.bf16.mxu0 %v1019
    %1202 = vmatmul.mubr.bf16.gmra.mrb[0].mxu0 %v1031
    %v1203 = vpop.f32.mrb[0].mxu0
    %v1204 = vadd.f32 %v1071, %v1203
    %v1205 = vpop.f32.mrb[0].mxu0
    %v1206 = vpop.f32.mrb[0].mxu0
    %v1207 = vadd.f32 %v1071, %v1206
    %v1208 = vpop.f32.mrb[0].mxu0
    %1209 = vdwg.mxu0
    %v1210 = vmax.f32 %v1204, 0.0
    %v1211 = vmax.f32 %v1207, 0.0
    %v1212 = vpack.c.bf16 %v1211, %v1210
    %v1213 = vrot.slane %v1210, 4
    %v1214 = vrot.slane %v1211, 4
    %v1215 = vsel %vm1022, %v1213, %v1214
    %v1216 = vsel %vm1022, %v1214, %v1213
    %v1217 = vsel %vm1027, %v1216, 0.0
    %v1218 = vsel %vm1028, %v1215, 0.0
    %v1219 = vpack.c.bf16 %v1218, %v1217
    %s1220 = scalar_lea.vmem [#allocation8], 256
    %v1221 = vld [vmem:[%s1220] sm:$0xf]
    %v1222 = vld [vmem:[%s1220 + $0x4] sm:$0xf]
    %v1223 = vld [vmem:[%s1220 + $0x8] sm:$0xf]
    %v1224 = vld [vmem:[%s1220 + $0xc] sm:$0xf]
    %v1225 = vld [vmem:[%s1220 + $0x10] sm:$0xf]
    %v1226 = vld [vmem:[%s1220 + $0x14] sm:$0xf]
    %v1227 = vld [vmem:[%s1220 + $0x18] sm:$0xf]
    %v1228 = vld [vmem:[%s1220 + $0x1c] sm:$0xf]
    %v1229 = vld [vmem:[%s1220 + $0x20] sm:$0xf]
    %v1230 = vld [vmem:[%s1220 + $0x24] sm:$0xf]
    %v1231 = vld [vmem:[%s1220 + $0x28] sm:$0xf]
    %v1232 = vld [vmem:[%s1220 + $0x2c] sm:$0xf]
    %v1233 = vld [vmem:[%s1220 + $0x30] sm:$0xf]
    %v1234 = vld [vmem:[%s1220 + $0x34] sm:$0xf]
    %v1235 = vld [vmem:[%s1220 + $0x38] sm:$0xf]
    %v1236 = vld [vmem:[%s1220 + $0x3c] sm:$0xf]
    %v1237 = vld [vmem:[%s1220 + $0x40] sm:$0xf]
    %v1238 = vld [vmem:[%s1220 + $0x44] sm:$0xf]
    %v1239 = vld [vmem:[%s1220 + $0x48] sm:$0xf]
    %v1240 = vld [vmem:[%s1220 + $0x4c] sm:$0xf]
    %v1241 = vld [vmem:[%s1220 + $0x50] sm:$0xf]
    %v1242 = vld [vmem:[%s1220 + $0x54] sm:$0xf]
    %v1243 = vld [vmem:[%s1220 + $0x58] sm:$0xf]
    %v1244 = vld [vmem:[%s1220 + $0x5c] sm:$0xf]
    %v1245 = vld [vmem:[%s1220 + $0x60] sm:$0xf]
    %v1246 = vld [vmem:[%s1220 + $0x64] sm:$0xf]
    %v1247 = vld [vmem:[%s1220 + $0x68] sm:$0xf]
    %v1248 = vld [vmem:[%s1220 + $0x6c] sm:$0xf]
    %v1249 = vld [vmem:[%s1220 + $0x70] sm:$0xf]
    %v1250 = vld [vmem:[%s1220 + $0x74] sm:$0xf]
    %v1251 = vld [vmem:[%s1220 + $0x78] sm:$0xf]
    %v1252 = vld [vmem:[%s1220 + $0x7c] sm:$0xf]
    %s1253 = scalar_lea.vmem %s5, 2
    %v1254 = vld [vmem:[%s1253] sm:$0x1]
    %v1256 = vlaneseq
    %v1257 = vshrl.u32 %v1256, 7
    %v1258 = vsub.s32 0, %v1257
    %v1259 = vrot.slane %v1254, %v1258
    %v1293 = vunpack.c.l.b16 %v1221
    %v1294 = vunpack.c.l.b16 %v1222
    %v1295 = vunpack.c.l.b16 %v1223
    %v1296 = vunpack.c.l.b16 %v1224
    %v1297 = vunpack.c.l.b16 %v1225
    %v1298 = vunpack.c.l.b16 %v1226
    %v1299 = vunpack.c.l.b16 %v1227
    %v1300 = vunpack.c.l.b16 %v1228
    %v1301 = vunpack.c.l.b16 %v1229
    %v1302 = vunpack.c.l.b16 %v1230
    %v1303 = vunpack.c.l.b16 %v1231
    %v1304 = vunpack.c.l.b16 %v1232
    %v1305 = vunpack.c.l.b16 %v1233
    %v1306 = vunpack.c.l.b16 %v1234
    %v1307 = vunpack.c.l.b16 %v1235
    %v1308 = vunpack.c.l.b16 %v1236
    %v1309 = vunpack.c.l.b16 %v1237
    %v1310 = vunpack.c.l.b16 %v1238
    %v1311 = vunpack.c.l.b16 %v1239
    %v1312 = vunpack.c.l.b16 %v1240
    %v1313 = vunpack.c.l.b16 %v1241
    %v1314 = vunpack.c.l.b16 %v1242
    %v1315 = vunpack.c.l.b16 %v1243
    %v1316 = vunpack.c.l.b16 %v1244
    %v1317 = vunpack.c.l.b16 %v1245
    %v1318 = vunpack.c.l.b16 %v1246
    %v1319 = vunpack.c.l.b16 %v1247
    %v1320 = vunpack.c.l.b16 %v1248
    %v1321 = vunpack.c.l.b16 %v1249
    %v1322 = vunpack.c.l.b16 %v1250
    %v1323 = vunpack.c.l.b16 %v1251
    %v1324 = vunpack.c.l.b16 %v1252
    %v1325 = vpack.c.b16 %v1294, %v1293
    %v1326 = vpack.c.b16 %v1296, %v1295
    %v1327 = vpack.c.b16 %v1298, %v1297
    %v1328 = vpack.c.b16 %v1300, %v1299
    %v1329 = vpack.c.b16 %v1302, %v1301
    %v1330 = vpack.c.b16 %v1304, %v1303
    %v1331 = vpack.c.b16 %v1306, %v1305
    %v1332 = vpack.c.b16 %v1308, %v1307
    %v1333 = vpack.c.b16 %v1310, %v1309
    %v1334 = vpack.c.b16 %v1312, %v1311
    %v1335 = vpack.c.b16 %v1314, %v1313
    %v1336 = vpack.c.b16 %v1316, %v1315
    %v1337 = vpack.c.b16 %v1318, %v1317
    %v1338 = vpack.c.b16 %v1320, %v1319
    %v1339 = vpack.c.b16 %v1322, %v1321
    %v1340 = vpack.c.b16 %v1324, %v1323
    %1357 = vmatprep.subr.bf16.mxu0 0
    %1358 = vmatpush1.bf16.msra.mxu0 %v1325
    %1359 = vmatprep.subr.bf16.mxu0 0
    %1360 = vmatpush1.bf16.msra.mxu0 %v1326
    %1361 = vmatprep.subr.bf16.mxu0 0
    %1362 = vmatpush1.bf16.msra.mxu0 %v1327
    %1363 = vmatprep.subr.bf16.mxu0 0
    %1364 = vmatpush1.bf16.msra.mxu0 %v1328
    %1365 = vmatprep.subr.bf16.mxu0 0
    %1366 = vmatpush1.bf16.msra.mxu0 %v1329
    %1367 = vmatprep.subr.bf16.mxu0 0
    %1368 = vmatpush1.bf16.msra.mxu0 %v1330
    %1369 = vmatprep.subr.bf16.mxu0 0
    %1370 = vmatpush1.bf16.msra.mxu0 %v1331
    %1371 = vmatprep.subr.bf16.mxu0 0
    %1372 = vmatpush1.bf16.msra.mxu0 %v1332
    %1373 = vmatprep.subr.bf16.mxu0 0
    %1374 = vmatpush1.bf16.msra.mxu0 %v1333
    %1375 = vmatprep.subr.bf16.mxu0 0
    %1376 = vmatpush1.bf16.msra.mxu0 %v1334
    %1377 = vmatprep.subr.bf16.mxu0 0
    %1378 = vmatpush1.bf16.msra.mxu0 %v1335
    %1379 = vmatprep.subr.bf16.mxu0 0
    %1380 = vmatpush1.bf16.msra.mxu0 %v1336
    %1381 = vmatprep.subr.bf16.mxu0 0
    %1382 = vmatpush1.bf16.msra.mxu0 %v1337
    %1383 = vmatprep.subr.bf16.mxu0 0
    %1384 = vmatpush1.bf16.msra.mxu0 %v1338
    %1385 = vmatprep.subr.bf16.mxu0 0
    %1386 = vmatpush1.bf16.msra.mxu0 %v1339
    %1387 = vmatprep.subr.bf16.mxu0 0
    %1388 = vmatpush1.bf16.msra.mxu0 %v1340
    %1389 = vmatprep.mubr.bf16.mxu0 %v1212
    %1390 = vmatmul.mubr.bf16.gmra.mrb[0].mxu0 %v1219
    %v1391 = vpop.f32.mrb[0].mxu0
    %v1392 = vadd.f32 %v1259, %v1391
    %v1393 = vpop.f32.mrb[0].mxu0
    %v1394 = vpop.f32.mrb[0].mxu0
    %v1395 = vadd.f32 %v1259, %v1394
    %v1396 = vpop.f32.mrb[0].mxu0
    %1397 = vdwg.mxu0
    %v1398 = vmax.f32 %v1392, 0.0
    %v1399 = vmax.f32 %v1395, 0.0
    %v1400 = vadd.f32 %v1398, %v1015
    %v1401 = vadd.f32 %v1399, %v1016
    %v1402 = vmax.f32 %v1400, 0.0
    %v1403 = vmax.f32 %v1401, 0.0
    %v1404 = vld [vmem:[#allocation5] sm:$0x1]
    %v1405 = vld [vmem:[#allocation5 + $0x1] sm:$0x1]
    %vm1406 = vcmask 57344
    %v1407 = vsel %vm1406, %v1404, 0.0
    %1408 = vadd.xlane.f32.xlu0 %v1407
    %v1409 = vpop.xlane.xlu0 %1408
    %v1410 = vsel %vm1406, %v1405, 0.0
    %1411 = vadd.xlane.f32.xlu0 %v1410
    %v1412 = vpop.xlane.xlu0 %1411
    %v1413 = vcvt.f32.s32.to.zero.pseudo %v1409
    %v1414 = vcvt.f32.s32.to.zero.pseudo %v1412
    %vm1415 = vcmp.gt.s32.totalorder %v1413, 0
    %vm1416 = vcmp.gt.s32.totalorder %v1414, 0
    %v1417 = vsub.s32 %v1413, 1
    %v1418 = vsub.s32 %v1414, 1
    %v1419 = vsel %vm1415, %v1417, 7
    %v1420 = vsel %vm1416, %v1418, 7
    %v1421 = vlaneseq
    %v1422 = vshrl.u32 %v1421, 7
    %v1423 = vsub.s32 0, %v1422
    %v1424 = vrot.slane %v1419, %v1423
    %v1425 = vlaneseq
    %v1426 = vshrl.u32 %v1425, 7
    %v1427 = vsub.s32 0, %v1426
    %v1428 = vrot.slane %v1420, %v1427
    %vm1429 = vcmp.eq.s32.totalorder %v104, %v1424
    %vm1430 = vcmp.eq.s32.totalorder %v104, %v1428
    %v1431 = vsel %vm1429, 1, 0
    %v1432 = vsel %vm1430, 1, 0
    %v1433 = vcvt.s32.f32 %v1431
    %v1434 = vcvt.s32.f32 %v1432
    %v1435 = vmul.f32 %v1402, %v1433
    %v1436 = vmul.f32 %v1403, %v1434
    %v1437 = vrot.slane %v1435, 4
    %v1438 = vadd.f32 %v1435, %v1437
    %v1439 = vrot.slane %v1438, 2
    %v1440 = vadd.f32 %v1438, %v1439
    %v1441 = vrot.slane %v1440, 1
    %v1442 = vadd.f32 %v1440, %v1441
    %v1443 = vrot.slane %v1436, 4
    %v1444 = vadd.f32 %v1436, %v1443
    %v1445 = vrot.slane %v1444, 2
    %v1446 = vadd.f32 %v1444, %v1445
    %v1447 = vrot.slane %v1446, 1
    %v1448 = vadd.f32 %v1446, %v1447
    %1449 = vst [vmem:[#allocation11] sm:$0x1] %v1442
    %1450 = vst [vmem:[#allocation11 + $0x1] sm:$0x1] %v1448
    // Predicated region
    $region54: #{tpu_custom_call.1} parent=1 // pred_check
      _
    $region55: #{tpu_custom_call.1} parent=1 // pred_check_branch
      %1452 = sbr.rel (0) target = $region57
    $region56: #{tpu_custom_call.1} parent=1 // pred_region
      %s1454 = ssub.s32 32, 32
      %1455 = vsyncadd [#allocation4], %s1454
      %s1456 = sshll.u32 [#allocation11], 4
      %s1457 = int_to_ptr.vmem [resolvable:$true] %s1456
      %1462 = dma.vmem_to_hbm [thread:$0]  %s1457, 32, %s8, [#allocation4], 16, 16, 1
    $region57: #{tpu_custom_call.1} parent=1 // pred_fallthru
      _
    // Predicated region
    $region58: #{tpu_custom_call.1} parent=1 // pred_check
      _
    $region59: #{tpu_custom_call.1} parent=1 // pred_check_branch
      %1464 = sbr.rel (0) target = $region61
    $region60: #{tpu_custom_call.1} parent=1 // pred_region
      %1465 = dma.done [#allocation4], 32
    $region61: #{tpu_custom_call.1} parent=1 // pred_fallthru
      _
    %1466 = vsyncpa [#allocation3], 1
    %1467 = vsyncpa [#allocation6], 1
    %1468 = vsyncpa [#allocation9], 1
    %1469 = vsyncpa [#allocation4], 1

</llo_original>
